<compile_context>
chip_gen: v6e
topology: v6e:2x2x1
jax: 0.10.0
libtpu: 0.0.40
codegen_flags: <defaults>
</compile_context>

<pallas_src>
import jax
import jax.numpy as jnp
import numpy as np
from jax import lax
from jax.experimental import pallas as pl
from jax.experimental.pallas import tpu as pltpu


# ---------------------------------------------------------------------------
# Pallas kernel: one batch tile per grid step.
#
# refs (Bt = batch tile, R1 = Bt*Ci, R2 = Bt*Co, Kp = padded #modes,
#       Ntot = Nx*Ny*Nz):
#   x_ref    : (R1, Ntot)    input slab, rows ordered (batch, in_channel)
#   fc_ref   : (Kp, Ntot)    cos DFT basis rows (truncated, zero padded)
#   fs_ref   : (Kp, Ntot)    -sin DFT basis rows
#   wr_ref   : (Ci, Co, Kp)  spectral weight, real part (coef/N folded in)
#   wi_ref   : (Ci, Co, Kp)  spectral weight, imag part (coef/N folded in)
#   wlin_ref : (R2, R1)      block-diagonal 1x1-conv weight
#   bias_ref : (R2, 1)       per-(batch, out_channel) bias
#   o_ref    : (R2, Ntot)    output slab, rows ordered (batch, out_channel)
#   yr_sc, yi_sc : (R2, Kp)  VMEM scratch for the mixed spectrum
# ---------------------------------------------------------------------------
def fourier_block3d_kernel(x_ref, fc_ref, fs_ref, wr_ref, wi_ref,
                           wlin_ref, bias_ref, o_ref, yr_sc, yi_sc):
    ci, co, kp = wr_ref.shape
    r1, ntot = x_ref.shape
    bt = r1 // ci

    x2 = x_ref[...]                                            # (R1, Ntot)
    fc = fc_ref[...]                                           # (Kp, Ntot)
    fs = fs_ref[...]

    # Forward truncated real 3-D DFT: two big MXU matmuls contracting the last
    # axes of both operands (NT form -> no in-kernel basis transpose).
    nt_dims = (((1,), (1,)), ((), ()))
    xr = lax.dot_general(x2, fc, nt_dims,
                         preferred_element_type=jnp.float32)   # (R1, Kp)
    xi = lax.dot_general(x2, fs, nt_dims,
                         preferred_element_type=jnp.float32)   # (R1, Kp)

    wr = wr_ref[...]
    wi = wi_ref[...]

    # Per-mode complex channel mixing out_ft = x_ft * W, unrolled over the
    # (small, static) batch tile; lane axis = padded mode axis.
    for b in range(bt):
        xr_b = xr[b * ci:(b + 1) * ci, :]                      # (Ci, Kp)
        xi_b = xi[b * ci:(b + 1) * ci, :]
        yr_sc[b * co:(b + 1) * co, :] = jnp.sum(
            xr_b[:, None, :] * wr - xi_b[:, None, :] * wi, axis=0)   # (Co, Kp)
        yi_sc[b * co:(b + 1) * co, :] = jnp.sum(
            xr_b[:, None, :] * wi + xi_b[:, None, :] * wr, axis=0)

    # Inverse truncated real 3-D DFT (irfftn of the zero-padded spectrum).
    # Reuses fc / fs: Hermitian coefficients and 1/(Nx*Ny*Nz) already live in
    # the spectral weights, so no separate ic/is bases are needed.
    spec = (jnp.dot(yr_sc[...], fc, preferred_element_type=jnp.float32) +
            jnp.dot(yi_sc[...], fs, preferred_element_type=jnp.float32))  # (R2, Ntot)

    # 1x1 convolution over channels for the whole batch tile as ONE matmul
    # with a block-diagonal weight, sharing the resident x slab.
    lin = jnp.dot(wlin_ref[...], x2, preferred_element_type=jnp.float32)  # (R2, Ntot)

    o_ref[...] = jnp.tanh(spec + lin + bias_ref[...]).astype(o_ref.dtype)


# ---------------------------------------------------------------------------
# Host-side constant construction.
# ---------------------------------------------------------------------------
def _dft_bases(Nx, Ny, Nz, n_modes, Kp):
    """Flattened truncated-rfftn basis.  Rows = selected (kx, ky, kz) modes in
    (low+high kx) x (low+high ky) x (low kz) order, cols = voxels row-major."""
    m1, m2, m3 = n_modes
    kx = np.concatenate([np.arange(m1), np.arange(Nx - m1, Nx)])
    ky = np.concatenate([np.arange(m2), np.arange(Ny - m2, Ny)])
    kz = np.arange(m3)
    KX, KY, KZ = (g.ravel() for g in np.meshgrid(kx, ky, kz, indexing="ij"))
    X, Y, Z = (g.ravel() for g in np.meshgrid(np.arange(Nx), np.arange(Ny),
                                              np.arange(Nz), indexing="ij"))
    ang = 2.0 * np.pi * (np.outer(KX, X) / Nx + np.outer(KY, Y) / Ny
                         + np.outer(KZ, Z) / Nz)
    fc = np.cos(ang)
    fs = -np.sin(ang)
    pad = Kp - fc.shape[0]
    if pad:
        fc = np.pad(fc, ((0, pad), (0, 0)))
        fs = np.pad(fs, ((0, pad), (0, 0)))
    return (jnp.asarray(fc.astype(np.float32)),
            jnp.asarray(fs.astype(np.float32)))


def _spectral_weights(w_real, w_imag, n_modes, Nx, Ny, Nz, Kp):
    """Assemble the four FNO corner weights into a single (Ci, Co, Kp)
    real/imag pair, with the irfftn Hermitian coefficients and the
    1/(Nx*Ny*Nz) normalisation folded in (so fc/fs are reused for the
    inverse transform)."""
    m1, m2, m3 = n_modes
    wr = np.asarray(w_real, dtype=np.float32)     # (4, Ci, Co, m1, m2, m3)
    wi = np.asarray(w_imag, dtype=np.float32)
    Ci, Co = wr.shape[1], wr.shape[2]
    Mx, My, Mz = 2 * m1, 2 * m2, m3
    Wr = np.zeros((Ci, Co, Mx, My, Mz), np.float32)
    Wi = np.zeros_like(Wr)
    Wr[:, :, :m1, :m2, :], Wi[:, :, :m1, :m2, :] = wr[0], wi[0]   # low kx, low ky
    Wr[:, :, m1:, :m2, :], Wi[:, :, m1:, :m2, :] = wr[1], wi[1]   # high kx, low ky
    Wr[:, :, :m1, m2:, :], Wi[:, :, :m1, m2:, :] = wr[2], wi[2]   # low kx, high ky
    Wr[:, :, m1:, m2:, :], Wi[:, :, m1:, m2:, :] = wr[3], wi[3]   # high kx, high ky

    kzs = np.arange(m3)
    coef = np.where(kzs == 0, 1.0, 2.0)            # Hermitian doubling along kz
    if Nz % 2 == 0:
        coef = np.where(kzs == Nz // 2, 1.0, coef)
    coef = (coef / float(Nx * Ny * Nz)).astype(np.float32)
    Wr = Wr * coef
    Wi = Wi * coef

    Mtot = Mx * My * Mz
    Wr = Wr.reshape(Ci, Co, Mtot)
    Wi = Wi.reshape(Ci, Co, Mtot)
    pad = Kp - Mtot
    if pad:
        Wr = np.pad(Wr, ((0, 0), (0, 0), (0, pad)))
        Wi = np.pad(Wi, ((0, 0), (0, 0), (0, pad)))
    return jnp.asarray(Wr), jnp.asarray(Wi)


def _block_diag_conv(w_lin, Bt):
    """Block-diagonal 1x1-conv weight so the conv of a whole batch tile is one
    (Bt*Co, Bt*Ci) x (Bt*Ci, Ntot) matmul on the flattened slab."""
    wl = np.asarray(w_lin, dtype=np.float32)       # (Co, Ci)
    Co, Ci = wl.shape
    A = np.zeros((Bt * Co, Bt * Ci), np.float32)
    for b in range(Bt):
        A[b * Co:(b + 1) * Co, b * Ci:(b + 1) * Ci] = wl
    return jnp.asarray(A)


def _pick_batch_tile(B, Ci, Co, Ntot, vmem_budget_bytes=8 << 20):
    """Largest batch tile whose x / out slabs stay within a modest VMEM budget
    (leaving room for double buffering and the bases, incl. 64 MiB-VMEM parts)
    while keeping slab row counts (8, 128)-aligned for the BlockSpecs."""
    for bt in range(B, 0, -1):
        if B % bt:
            continue
        tile_bytes = bt * max(Ci, Co) * Ntot * 4
        aligned = (bt == B) or ((bt * Ci) % 8 == 0 and (bt * Co) % 8 == 0)
        if tile_bytes <= vmem_budget_bytes and aligned:
            return bt
    return B


# ---------------------------------------------------------------------------
# Wrapper: builds constants and launches the kernel.
# ---------------------------------------------------------------------------
def fourier_block_3d(x, w_real, w_imag, w_lin, b_lin, n_modes, batch_tile=None):
    """Pallas-TPU forward pass of PINA's FourierBlock3D.

    x       : (B, Ci, Nx, Ny, Nz) float32
    w_real  : (4, Ci, Co, m1, m2, m3)  real parts of the 4 corner weights
    w_imag  : (4, Ci, Co, m1, m2, m3)  imaginary parts
    w_lin   : (Co, Ci)  1x1 Conv3d weight,  b_lin : (Co,) bias
    n_modes : (m1, m2, m3)
    """
    B, Ci, Nx, Ny, Nz = x.shape
    m1, m2, m3 = (int(m) for m in n_modes)
    Co = w_real.shape[2]
    if not (2 * m1 <= Nx and 2 * m2 <= Ny and m3 <= Nz // 2 + 1):
        raise ValueError("n_modes must satisfy 2*m1<=Nx, 2*m2<=Ny, m3<=Nz//2+1")

    Ntot = Nx * Ny * Nz
    Mtot = (2 * m1) * (2 * m2) * m3
    # Lane-dense padded mode count (padded modes have zero weight -> inert).
    Kp = ((Mtot + 127) // 128) * 128

    Bt = batch_tile if batch_tile is not None else _pick_batch_tile(B, Ci, Co, Ntot)
    assert B % Bt == 0, "batch_tile must divide the batch size"

    fc, fs = _dft_bases(Nx, Ny, Nz, (m1, m2, m3), Kp)
    wr_k, wi_k = _spectral_weights(w_real, w_imag, (m1, m2, m3), Nx, Ny, Nz, Kp)
    wbd = _block_diag_conv(w_lin, Bt)
    bias = jnp.asarray(np.tile(np.asarray(b_lin, np.float32), Bt).reshape(Bt * Co, 1))

    # Flatten batch*channel onto the sublane axis, voxels onto the lane axis.
    x2d = x.reshape(B * Ci, Ntot).astype(jnp.float32)

    grid = (B // Bt,)
    const = lambda shape: pl.BlockSpec(shape, lambda b: (0,) * len(shape))

    out2d = pl.pallas_call(
        fourier_block3d_kernel,
        out_shape=jax.ShapeDtypeStruct((B * Co, Ntot), jnp.float32),
        grid_spec=pltpu.PrefetchScalarGridSpec(
            num_scalar_prefetch=0,
            grid=grid,
            in_specs=[
                pl.BlockSpec((Bt * Ci, Ntot), lambda b: (b, 0)),   # x slab
                const((Kp, Ntot)),                                 # fc
                const((Kp, Ntot)),                                 # fs
                const((Ci, Co, Kp)),                               # W real
                const((Ci, Co, Kp)),                               # W imag
                const((Bt * Co, Bt * Ci)),                         # block-diag conv
                const((Bt * Co, 1)),                               # bias
            ],
            out_specs=pl.BlockSpec((Bt * Co, Ntot), lambda b: (b, 0)),
            scratch_shapes=[
                pltpu.VMEM((Bt * Co, Kp), jnp.float32),            # yr scratch
                pltpu.VMEM((Bt * Co, Kp), jnp.float32),            # yi scratch
            ],
        ),
        compiler_params=pltpu.CompilerParams(
            # Independent batch tiles -> megacore / multi-TC sharding.
            # NOTE: for large Nx*Ny*Nz or n_modes also set vmem_limit_bytes and
            # shrink the batch tile to stay inside 64 MiB-VMEM parts (v7x).
            dimension_semantics=("parallel",),
        ),
    )(x2d, fc, fs, wr_k, wi_k, wbd, bias)

    return out2d.reshape(B, Co, Nx, Ny, Nz)


# ---------------------------------------------------------------------------
# Pure-JAX reference mirroring the PyTorch module (FFT based), for checking.
# ---------------------------------------------------------------------------
def fourier_block_3d_ref(x, w_real, w_imag, w_lin, b_lin, n_modes):
    B, Ci, Nx, Ny, Nz = x.shape
    m1, m2, m3 = n_modes
    w = (w_real + 1j * w_imag).astype(jnp.complex64)   # (4, Ci, Co, m1, m2, m3)
    Co = w.shape[2]

    x_ft = jnp.fft.rfftn(x, axes=(-3, -2, -1))
    out_ft = jnp.zeros((B, Co, Nx, Ny, Nz // 2 + 1), dtype=jnp.complex64)
    mul = lambda inp, wt: jnp.einsum("bixyz,ioxyz->boxyz", inp, wt)
    out_ft = out_ft.at[:, :, :m1, :m2, :m3].set(
        mul(x_ft[:, :, :m1, :m2, :m3], w[0]))
    out_ft = out_ft.at[:, :, Nx - m1:, :m2, :m3].set(
        mul(x_ft[:, :, Nx - m1:, :m2, :m3], w[1]))
    out_ft = out_ft.at[:, :, :m1, Ny - m2:, :m3].set(
        mul(x_ft[:, :, :m1, Ny - m2:, :m3], w[2]))
    out_ft = out_ft.at[:, :, Nx - m1:, Ny - m2:, :m3].set(
        mul(x_ft[:, :, Nx - m1:, Ny - m2:, :m3], w[3]))
    spec = jnp.fft.irfftn(out_ft, s=(Nx, Ny, Nz), axes=(-3, -2, -1))

    lin = jnp.einsum("oi,bixyz->boxyz", w_lin, x) + b_lin[None, :, None, None, None]
    return jnp.tanh(spec + lin)


if __name__ == "__main__":
    # Small shapes consistent with the module: [batch, channels, Nx, Ny, Nz].
    B, Ci, Co = 2, 4, 4
    Nx = Ny = Nz = 8
    n_modes = (2, 2, 2)

    key = jax.random.PRNGKey(0)
    k_x, k_wr, k_wi, k_wl, k_bl = jax.random.split(key, 5)

    x = jax.random.normal(k_x, (B, Ci, Nx, Ny, Nz), dtype=jnp.float32)

    # SpectralConvBlock3D: four corner weights = scale * rand(Ci, Co, m1, m2, m3).
    scale = 1.0 / (Ci * Co)
    m1, m2, m3 = n_modes
    w_real = scale * jax.random.uniform(k_wr, (4, Ci, Co, m1, m2, m3), dtype=jnp.float32)
    w_imag = scale * jax.random.uniform(k_wi, (4, Ci, Co, m1, m2, m3), dtype=jnp.float32)

    # nn.Conv3d(Ci, Co, 1): weight (Co, Ci, 1, 1, 1) -> (Co, Ci), bias (Co,).
    bound = 1.0 / np.sqrt(Ci)
    w_lin = jax.random.uniform(k_wl, (Co, Ci), minval=-bound, maxval=bound,
                               dtype=jnp.float32)
    b_lin = jax.random.uniform(k_bl, (Co,), minval=-bound, maxval=bound,
                               dtype=jnp.float32)

    out = fourier_block_3d(x, w_real, w_imag, w_lin, b_lin, n_modes)
    out = jax.block_until_ready(out)

    ref = fourier_block_3d_ref(x, w_real, w_imag, w_lin, b_lin, n_modes)
    np.testing.assert_allclose(np.asarray(out), np.asarray(ref),
                               rtol=1e-3, atol=1e-4)

    print("KERNEL_OK")
</pallas_src>

<mosaic_0001>
module attributes {stable_mosaic.version = 11 : i64} {
  func.func @fourier_block3d_kernel(%arg0: i32, %arg1: memref<8x512xf32, #tpu.memory_space<vmem>>, %arg2: memref<128x512xf32, #tpu.memory_space<vmem>>, %arg3: memref<128x512xf32, #tpu.memory_space<vmem>>, %arg4: memref<4x4x128xf32, #tpu.memory_space<vmem>>, %arg5: memref<4x4x128xf32, #tpu.memory_space<vmem>>, %arg6: memref<8x8xf32, #tpu.memory_space<vmem>>, %arg7: memref<8x1xf32, #tpu.memory_space<vmem>>, %arg8: memref<8x512xf32, #tpu.memory_space<vmem>>, %arg9: memref<8x128xf32, #tpu.memory_space<vmem>>, %arg10: memref<8x128xf32, #tpu.memory_space<vmem>>) attributes {dimension_semantics = [#tpu.dimension_semantics<parallel>], iteration_bounds = array<i64: 1>, scalar_prefetch = 0 : i64, scratch_operands = 2 : i64, tpu.core_type = #tpu.core_type<tc>, window_params = [{transform_indices = @transform_0, window_bounds = array<i64: 8, 512>}, {pipeline_mode = #tpu.pipeline_mode<synchronous>, transform_indices = @transform_1, window_bounds = array<i64: 128, 512>}, {pipeline_mode = #tpu.pipeline_mode<synchronous>, transform_indices = @transform_2, window_bounds = array<i64: 128, 512>}, {pipeline_mode = #tpu.pipeline_mode<synchronous>, transform_indices = @transform_3, window_bounds = array<i64: 4, 4, 128>}, {pipeline_mode = #tpu.pipeline_mode<synchronous>, transform_indices = @transform_4, window_bounds = array<i64: 4, 4, 128>}, {pipeline_mode = #tpu.pipeline_mode<synchronous>, transform_indices = @transform_5, window_bounds = array<i64: 8, 8>}, {pipeline_mode = #tpu.pipeline_mode<synchronous>, transform_indices = @transform_6, window_bounds = array<i64: 8, 1>}, {transform_indices = @transform_7, window_bounds = array<i64: 8, 512>}]} {
    %c0 = arith.constant 0 : index
    %c0_0 = arith.constant 0 : index
    %0 = vector.load %arg1[%c0, %c0_0] : memref<8x512xf32, #tpu.memory_space<vmem>>, vector<8x512xf32>
    %c0_1 = arith.constant 0 : index
    %c0_2 = arith.constant 0 : index
    %1 = vector.load %arg2[%c0_1, %c0_2] : memref<128x512xf32, #tpu.memory_space<vmem>>, vector<128x512xf32>
    %c0_3 = arith.constant 0 : index
    %c0_4 = arith.constant 0 : index
    %2 = vector.load %arg3[%c0_3, %c0_4] : memref<128x512xf32, #tpu.memory_space<vmem>>, vector<128x512xf32>
    %cst = arith.constant dense<0.000000e+00> : vector<8x128xf32>
    %3 = tpu.matmul %0, %1, %cst {dimension_numbers = #tpu.dot_dimension_numbers<[1], [1], [0], [0], [0, 0, 1, 0], [], []>} : vector<8x512xf32>, vector<128x512xf32>, vector<8x128xf32> -> vector<8x128xf32>
    %cst_5 = arith.constant dense<0.000000e+00> : vector<8x128xf32>
    %4 = tpu.matmul %0, %2, %cst_5 {dimension_numbers = #tpu.dot_dimension_numbers<[1], [1], [0], [0], [0, 0, 1, 0], [], []>} : vector<8x512xf32>, vector<128x512xf32>, vector<8x128xf32> -> vector<8x128xf32>
    %c0_6 = arith.constant 0 : index
    %c0_7 = arith.constant 0 : index
    %c0_8 = arith.constant 0 : index
    %5 = vector.load %arg4[%c0_6, %c0_7, %c0_8] : memref<4x4x128xf32, #tpu.memory_space<vmem>>, vector<4x4x128xf32>
    %c0_9 = arith.constant 0 : index
    %c0_10 = arith.constant 0 : index
    %c0_11 = arith.constant 0 : index
    %6 = vector.load %arg5[%c0_9, %c0_10, %c0_11] : memref<4x4x128xf32, #tpu.memory_space<vmem>>, vector<4x4x128xf32>
    %7 = vector.extract_strided_slice %3 {offsets = [0, 0], sizes = [4, 128], strides = [1, 1]} : vector<8x128xf32> to vector<4x128xf32>
    %8 = vector.extract_strided_slice %4 {offsets = [0, 0], sizes = [4, 128], strides = [1, 1]} : vector<8x128xf32> to vector<4x128xf32>
    %9 = vector.shape_cast %7 : vector<4x128xf32> to vector<4x1x128xf32>
    %10 = vector.broadcast %9 : vector<4x1x128xf32> to vector<4x4x128xf32>
    %11 = arith.mulf %10, %5 : vector<4x4x128xf32>
    %12 = vector.shape_cast %8 : vector<4x128xf32> to vector<4x1x128xf32>
    %13 = vector.broadcast %12 : vector<4x1x128xf32> to vector<4x4x128xf32>
    %14 = arith.mulf %13, %6 : vector<4x4x128xf32>
    %15 = arith.subf %11, %14 : vector<4x4x128xf32>
    %cst_12 = arith.constant dense<0.000000e+00> : vector<4x128xf32>
    %16 = vector.multi_reduction <add>, %15, %cst_12 [0] : vector<4x4x128xf32> to vector<4x128xf32>
    %c0_13 = arith.constant 0 : index
    %c0_14 = arith.constant 0 : index
    %17 = vector.load %arg9[%c0_13, %c0_14] : memref<8x128xf32, #tpu.memory_space<vmem>>, vector<4x128xf32>
    tpu.vector_store %arg9[%c0_13, %c0_14], %16 {strides = array<i32>} : memref<8x128xf32, #tpu.memory_space<vmem>>, vector<4x128xf32>,
    %18 = vector.shape_cast %7 : vector<4x128xf32> to vector<4x1x128xf32>
    %19 = vector.broadcast %18 : vector<4x1x128xf32> to vector<4x4x128xf32>
    %20 = arith.mulf %19, %6 : vector<4x4x128xf32>
    %21 = vector.shape_cast %8 : vector<4x128xf32> to vector<4x1x128xf32>
    %22 = vector.broadcast %21 : vector<4x1x128xf32> to vector<4x4x128xf32>
    %23 = arith.mulf %22, %5 : vector<4x4x128xf32>
    %24 = arith.addf %20, %23 : vector<4x4x128xf32>
    %cst_15 = arith.constant dense<0.000000e+00> : vector<4x128xf32>
    %25 = vector.multi_reduction <add>, %24, %cst_15 [0] : vector<4x4x128xf32> to vector<4x128xf32>
    %c0_16 = arith.constant 0 : index
    %c0_17 = arith.constant 0 : index
    %26 = vector.load %arg10[%c0_16, %c0_17] : memref<8x128xf32, #tpu.memory_space<vmem>>, vector<4x128xf32>
    tpu.vector_store %arg10[%c0_16, %c0_17], %25 {strides = array<i32>} : memref<8x128xf32, #tpu.memory_space<vmem>>, vector<4x128xf32>,
    %27 = vector.extract_strided_slice %3 {offsets = [4, 0], sizes = [4, 128], strides = [1, 1]} : vector<8x128xf32> to vector<4x128xf32>
    %28 = vector.extract_strided_slice %4 {offsets = [4, 0], sizes = [4, 128], strides = [1, 1]} : vector<8x128xf32> to vector<4x128xf32>
    %29 = vector.shape_cast %27 : vector<4x128xf32> to vector<4x1x128xf32>
    %30 = vector.broadcast %29 : vector<4x1x128xf32> to vector<4x4x128xf32>
    %31 = arith.mulf %30, %5 : vector<4x4x128xf32>
    %32 = vector.shape_cast %28 : vector<4x128xf32> to vector<4x1x128xf32>
    %33 = vector.broadcast %32 : vector<4x1x128xf32> to vector<4x4x128xf32>
    %34 = arith.mulf %33, %6 : vector<4x4x128xf32>
    %35 = arith.subf %31, %34 : vector<4x4x128xf32>
    %cst_18 = arith.constant dense<0.000000e+00> : vector<4x128xf32>
    %36 = vector.multi_reduction <add>, %35, %cst_18 [0] : vector<4x4x128xf32> to vector<4x128xf32>
    %c4 = arith.constant 4 : index
    %c0_19 = arith.constant 0 : index
    %37 = vector.load %arg9[%c4, %c0_19] : memref<8x128xf32, #tpu.memory_space<vmem>>, vector<4x128xf32>
    tpu.vector_store %arg9[%c4, %c0_19], %36 {strides = array<i32>} : memref<8x128xf32, #tpu.memory_space<vmem>>, vector<4x128xf32>,
    %38 = vector.shape_cast %27 : vector<4x128xf32> to vector<4x1x128xf32>
    %39 = vector.broadcast %38 : vector<4x1x128xf32> to vector<4x4x128xf32>
    %40 = arith.mulf %39, %6 : vector<4x4x128xf32>
    %41 = vector.shape_cast %28 : vector<4x128xf32> to vector<4x1x128xf32>
    %42 = vector.broadcast %41 : vector<4x1x128xf32> to vector<4x4x128xf32>
    %43 = arith.mulf %42, %5 : vector<4x4x128xf32>
    %44 = arith.addf %40, %43 : vector<4x4x128xf32>
    %cst_20 = arith.constant dense<0.000000e+00> : vector<4x128xf32>
    %45 = vector.multi_reduction <add>, %44, %cst_20 [0] : vector<4x4x128xf32> to vector<4x128xf32>
    %c4_21 = arith.constant 4 : index
    %c0_22 = arith.constant 0 : index
    %46 = vector.load %arg10[%c4_21, %c0_22] : memref<8x128xf32, #tpu.memory_space<vmem>>, vector<4x128xf32>
    tpu.vector_store %arg10[%c4_21, %c0_22], %45 {strides = array<i32>} : memref<8x128xf32, #tpu.memory_space<vmem>>, vector<4x128xf32>,
    %c0_23 = arith.constant 0 : index
    %c0_24 = arith.constant 0 : index
    %47 = vector.load %arg9[%c0_23, %c0_24] : memref<8x128xf32, #tpu.memory_space<vmem>>, vector<8x128xf32>
    %cst_25 = arith.constant dense<0.000000e+00> : vector<8x512xf32>
    %48 = tpu.matmul %47, %1, %cst_25 {dimension_numbers = #tpu.dot_dimension_numbers<[1], [0], [0], [1], [0, 0, 1, 1], [], []>} : vector<8x128xf32>, vector<128x512xf32>, vector<8x512xf32> -> vector<8x512xf32>
    %c0_26 = arith.constant 0 : index
    %c0_27 = arith.constant 0 : index
    %49 = vector.load %arg10[%c0_26, %c0_27] : memref<8x128xf32, #tpu.memory_space<vmem>>, vector<8x128xf32>
    %cst_28 = arith.constant dense<0.000000e+00> : vector<8x512xf32>
    %50 = tpu.matmul %49, %2, %cst_28 {dimension_numbers = #tpu.dot_dimension_numbers<[1], [0], [0], [1], [0, 0, 1, 1], [], []>} : vector<8x128xf32>, vector<128x512xf32>, vector<8x512xf32> -> vector<8x512xf32>
    %51 = arith.addf %48, %50 : vector<8x512xf32>
    %c0_29 = arith.constant 0 : index
    %c0_30 = arith.constant 0 : index
    %52 = vector.load %arg6[%c0_29, %c0_30] : memref<8x8xf32, #tpu.memory_space<vmem>>, vector<8x8xf32>
    %cst_31 = arith.constant dense<0.000000e+00> : vector<8x512xf32>
    %53 = tpu.matmul %52, %0, %cst_31 {dimension_numbers = #tpu.dot_dimension_numbers<[1], [0], [0], [1], [0, 0, 1, 1], [], []>} : vector<8x8xf32>, vector<8x512xf32>, vector<8x512xf32> -> vector<8x512xf32>
    %54 = arith.addf %51, %53 : vector<8x512xf32>
    %c0_32 = arith.constant 0 : index
    %c0_33 = arith.constant 0 : index
    %55 = vector.load %arg7[%c0_32, %c0_33] : memref<8x1xf32, #tpu.memory_space<vmem>>, vector<8x1xf32>
    %56 = vector.broadcast %55 : vector<8x1xf32> to vector<8x512xf32>
    %57 = arith.addf %54, %56 : vector<8x512xf32>
    %58 = math.tanh %57 : vector<8x512xf32>
    %c0_34 = arith.constant 0 : index
    %c0_35 = arith.constant 0 : index
    %59 = vector.load %arg8[%c0_34, %c0_35] : memref<8x512xf32, #tpu.memory_space<vmem>>, vector<8x512xf32>
    tpu.vector_store %arg8[%c0_34, %c0_35], %58 {strides = array<i32>} : memref<8x512xf32, #tpu.memory_space<vmem>>, vector<8x512xf32>,
    return
  }
  func.func @transform_0(%arg0: i32) -> (i32, i32) {
    %c0_i32 = arith.constant 0 : i32
    %c0_i32_0 = arith.constant 0 : i32
    return %arg0, %c0_i32 : i32, i32
  }
  func.func @transform_1(%arg0: i32) -> (i32, i32) {
    %c0_i32 = arith.constant 0 : i32
    %c0_i32_0 = arith.constant 0 : i32
    %c0_i32_1 = arith.constant 0 : i32
    return %c0_i32, %c0_i32_0 : i32, i32
  }
  func.func @transform_2(%arg0: i32) -> (i32, i32) {
    %c0_i32 = arith.constant 0 : i32
    %c0_i32_0 = arith.constant 0 : i32
    %c0_i32_1 = arith.constant 0 : i32
    return %c0_i32, %c0_i32_0 : i32, i32
  }
  func.func @transform_3(%arg0: i32) -> (i32, i32, i32) {
    %c0_i32 = arith.constant 0 : i32
    %c0_i32_0 = arith.constant 0 : i32
    %c0_i32_1 = arith.constant 0 : i32
    %c0_i32_2 = arith.constant 0 : i32
    return %c0_i32, %c0_i32_0, %c0_i32_1 : i32, i32, i32
  }
  func.func @transform_4(%arg0: i32) -> (i32, i32, i32) {
    %c0_i32 = arith.constant 0 : i32
    %c0_i32_0 = arith.constant 0 : i32
    %c0_i32_1 = arith.constant 0 : i32
    %c0_i32_2 = arith.constant 0 : i32
    return %c0_i32, %c0_i32_0, %c0_i32_1 : i32, i32, i32
  }
  func.func @transform_5(%arg0: i32) -> (i32, i32) {
    %c0_i32 = arith.constant 0 : i32
    %c0_i32_0 = arith.constant 0 : i32
    %c0_i32_1 = arith.constant 0 : i32
    return %c0_i32, %c0_i32_0 : i32, i32
  }
  func.func @transform_6(%arg0: i32) -> (i32, i32) {
    %c0_i32 = arith.constant 0 : i32
    %c0_i32_0 = arith.constant 0 : i32
    %c0_i32_1 = arith.constant 0 : i32
    return %c0_i32, %c0_i32_0 : i32, i32
  }
  func.func @transform_7(%arg0: i32) -> (i32, i32) {
    %c0_i32 = arith.constant 0 : i32
    %c0_i32_0 = arith.constant 0 : i32
    return %arg0, %c0_i32 : i32, i32
  }
}

</mosaic_0001>

<llo_original>
// kernel: tpu_custom_call.1
$region0: #{tpu_custom_call.1}
  #allocation0 [shape = 'u32[]', space=smem, size = 0x4, offset = 0x4, fixed_abs, tag = 'smem constant byte address 0x4 - core index']
  #allocation1 [shape = 'u32[144,128]{1,0:T(1,128)}', space=vmem, size = 0x12000, scoped, tag = 'internal scratch']
  #allocation2 [shape = 'f32[8,128]{1,0:T(8,128)}', space=vmem, size = 0x1000, scoped, tag = 'scratch operand']
  #allocation3 [shape = 'f32[8,128]{1,0:T(8,128)}', space=vmem, size = 0x1000, scoped, tag = 'scratch operand']
  %s0 = inlined_call_operand.hbm [shape: f32[8,512], index: 0, kind: input, shape index: {}]
  %s1 = inlined_call_operand.hbm [shape: f32[128,512], index: 1, kind: input, shape index: {}]
  %s2 = inlined_call_operand.hbm [shape: f32[128,512], index: 2, kind: input, shape index: {}]
  %s3 = inlined_call_operand.hbm [shape: f32[4,4,128], index: 3, kind: input, shape index: {}]
  %s4 = inlined_call_operand.vmem [shape: f32[4,4,128], index: 4, kind: input, shape index: {}]
  %s5 = inlined_call_operand.hbm [shape: f32[8,8], index: 5, kind: input, shape index: {}]
  %s6 = inlined_call_operand.vmem [shape: f32[8,1], index: 6, kind: input, shape index: {}]
  %s7 = inlined_call_operand.hbm [shape: f32[8,512], index: 7, kind: output, shape index: {}]
  %s8 = sld [smem:[#allocation0]]
  $region58: #{tpu_custom_call.1} parent=0
    _
  %s10 = ssub.s32 1, %s8
  %s11 = scalar_select 0, %s10, %s8
  $region1: #{tpu_custom_call.1} parent=0
    #allocation4 [shape = 'u8[16384]{0}', space=vmem, size = 0x4000, scoped, tag = 'input window, operand 0, single buffered']
    #allocation5 [shape = 's32[1]{0}', space=sflag, size = 0x4, scoped, tag = 'scoped memory for tpu_custom_call.1']
    #allocation6 [shape = 's32[1]{0}', space=sflag, size = 0x4, scoped, tag = 'scoped memory for tpu_custom_call.1']
    #allocation7 [shape = 'u8[262144]{0}', space=vmem, size = 0x40000, scoped, tag = 'input window, operand 1, single buffered']
    #allocation8 [shape = 's32[1]{0}', space=sflag, size = 0x4, scoped, tag = 'scoped memory for tpu_custom_call.1']
    #allocation9 [shape = 'u8[262144]{0}', space=vmem, size = 0x40000, scoped, tag = 'input window, operand 2, single buffered']
    #allocation10 [shape = 'u8[8192]{0}', space=vmem, size = 0x2000, scoped, tag = 'input window, operand 3, single buffered']
    #allocation11 [shape = 's32[1]{0}', space=sflag, size = 0x4, scoped, tag = 'scoped memory for tpu_custom_call.1']
    #allocation12 [shape = 'u8[4096]{0}', space=vmem, size = 0x1000, scoped, tag = 'input window, operand 5, single buffered']
    #allocation13 [shape = 'u8[16384]{0}', space=vmem, size = 0x4000, scoped, tag = 'output window, operand 0, single buffered']
    %12 = vsyncpa [#allocation5], 0
    %13 = vsyncpa [#allocation8], 0
    %14 = vsyncpa [#allocation11], 0
    %15 = vsyncpa [#allocation6], 0
    // Predicated region
    $region2: #{tpu_custom_call.1} parent=1 // pred_check
      _
    $region3: #{tpu_custom_call.1} parent=1 // pred_check_branch
      %17 = sbr.rel (0) target = $region5
    $region4: #{tpu_custom_call.1} parent=1 // pred_region
      %s19 = ssub.s32 512, 512
      %20 = vsyncadd [#allocation5], %s19
      %s22 = sshll.u32 [#allocation4], 4
      %s23 = int_to_ptr.vmem [resolvable:$true] %s22
      %25 = dma.hbm_to_vmem [thread:$0]  %s0, 512, %s23, [#allocation5]
    $region5: #{tpu_custom_call.1} parent=1 // pred_fallthru
      _
    // Predicated region
    $region6: #{tpu_custom_call.1} parent=1 // pred_check
      _
    $region7: #{tpu_custom_call.1} parent=1 // pred_check_branch
      %27 = sbr.rel (0) target = $region9
    $region8: #{tpu_custom_call.1} parent=1 // pred_region
      %s29 = ssub.s32 8192, 8192
      %30 = vsyncadd [#allocation8], %s29
      %s31 = sshll.u32 [#allocation7], 4
      %s32 = int_to_ptr.vmem [resolvable:$true] %s31
      %37 = dma.hbm_to_vmem [thread:$0]  %s1, 8192, %s32, [#allocation8], 512, 512, 32
    $region9: #{tpu_custom_call.1} parent=1 // pred_fallthru
      _
    // Predicated region
    $region10: #{tpu_custom_call.1} parent=1 // pred_check
      _
    $region11: #{tpu_custom_call.1} parent=1 // pred_check_branch
      %39 = sbr.rel (0) target = $region13
    $region12: #{tpu_custom_call.1} parent=1 // pred_region
      %s41 = ssub.s32 8192, 8192
      %42 = vsyncadd [#allocation8], %s41
      %s43 = sshll.u32 [#allocation9], 4
      %s44 = int_to_ptr.vmem [resolvable:$true] %s43
      %49 = dma.hbm_to_vmem [thread:$0]  %s2, 8192, %s44, [#allocation8], 512, 512, 32
    $region13: #{tpu_custom_call.1} parent=1 // pred_fallthru
      _
    // Predicated region
    $region14: #{tpu_custom_call.1} parent=1 // pred_check
      _
    $region15: #{tpu_custom_call.1} parent=1 // pred_check_branch
      %51 = sbr.rel (0) target = $region17
    $region16: #{tpu_custom_call.1} parent=1 // pred_region
      %s53 = ssub.s32 256, 256
      %54 = vsyncadd [#allocation11], %s53
      %s55 = sshll.u32 [#allocation10], 4
      %s56 = int_to_ptr.vmem [resolvable:$true] %s55
      %61 = dma.hbm_to_vmem [thread:$0]  %s3, 256, %s56, [#allocation11], 64, 64, 4
    $region17: #{tpu_custom_call.1} parent=1 // pred_fallthru
      _
    // Predicated region
    $region18: #{tpu_custom_call.1} parent=1 // pred_check
      _
    $region19: #{tpu_custom_call.1} parent=1 // pred_check_branch
      %63 = sbr.rel (0) target = $region21
    $region20: #{tpu_custom_call.1} parent=1 // pred_region
      _
    $region21: #{tpu_custom_call.1} parent=1 // pred_fallthru
      _
    // Predicated region
    $region22: #{tpu_custom_call.1} parent=1 // pred_check
      _
    $region23: #{tpu_custom_call.1} parent=1 // pred_check_branch
      %65 = sbr.rel (0) target = $region25
    $region24: #{tpu_custom_call.1} parent=1 // pred_region
      %s67 = ssub.s32 128, 128
      %68 = vsyncadd [#allocation11], %s67
      %s70 = sshll.u32 [#allocation12], 4
      %s71 = int_to_ptr.vmem [resolvable:$true] %s70
      %73 = dma.hbm_to_vmem [thread:$0]  %s5, 128, %s71, [#allocation11]
    $region25: #{tpu_custom_call.1} parent=1 // pred_fallthru
      _
    // Predicated region
    $region26: #{tpu_custom_call.1} parent=1 // pred_check
      _
    $region27: #{tpu_custom_call.1} parent=1 // pred_check_branch
      %75 = sbr.rel (0) target = $region29
    $region28: #{tpu_custom_call.1} parent=1 // pred_region
      _
    $region29: #{tpu_custom_call.1} parent=1 // pred_fallthru
      _
    // Predicated region
    $region30: #{tpu_custom_call.1} parent=1 // pred_check
      _
    $region31: #{tpu_custom_call.1} parent=1 // pred_check_branch
      %77 = sbr.rel (0) target = $region33
    $region32: #{tpu_custom_call.1} parent=1 // pred_region
      %78 = dma.done [#allocation5], 512
    $region33: #{tpu_custom_call.1} parent=1 // pred_fallthru
      _
    // Predicated region
    $region34: #{tpu_custom_call.1} parent=1 // pred_check
      _
    $region35: #{tpu_custom_call.1} parent=1 // pred_check_branch
      %80 = sbr.rel (0) target = $region37
    $region36: #{tpu_custom_call.1} parent=1 // pred_region
      %81 = dma.done [#allocation8], 8192
    $region37: #{tpu_custom_call.1} parent=1 // pred_fallthru
      _
    // Predicated region
    $region38: #{tpu_custom_call.1} parent=1 // pred_check
      _
    $region39: #{tpu_custom_call.1} parent=1 // pred_check_branch
      %83 = sbr.rel (0) target = $region41
    $region40: #{tpu_custom_call.1} parent=1 // pred_region
      %84 = dma.done [#allocation8], 8192
    $region41: #{tpu_custom_call.1} parent=1 // pred_fallthru
      _
    // Predicated region
    $region42: #{tpu_custom_call.1} parent=1 // pred_check
      _
    $region43: #{tpu_custom_call.1} parent=1 // pred_check_branch
      %86 = sbr.rel (0) target = $region45
    $region44: #{tpu_custom_call.1} parent=1 // pred_region
      %87 = dma.done [#allocation11], 256
    $region45: #{tpu_custom_call.1} parent=1 // pred_fallthru
      _
    // Predicated region
    $region46: #{tpu_custom_call.1} parent=1 // pred_check
      _
    $region47: #{tpu_custom_call.1} parent=1 // pred_check_branch
      %89 = sbr.rel (0) target = $region49
    $region48: #{tpu_custom_call.1} parent=1 // pred_region
      %90 = dma.done [#allocation11], 128
    $region49: #{tpu_custom_call.1} parent=1 // pred_fallthru
      _
    %v91 = vld [vmem:[#allocation4] sm:$0xff]
    %v92 = vld [vmem:[#allocation4 + $0x8] sm:$0xff]
    %v93 = vld [vmem:[#allocation4 + $0x10] sm:$0xff]
    %v94 = vld [vmem:[#allocation4 + $0x18] sm:$0xff]
    %v95 = vld [vmem:[#allocation7] sm:$0xff]
    %v96 = vld [vmem:[#allocation7 + $0x8] sm:$0xff]
    %v97 = vld [vmem:[#allocation7 + $0x10] sm:$0xff]
    %v98 = vld [vmem:[#allocation7 + $0x18] sm:$0xff]
    %v99 = vld [vmem:[#allocation7 + $0x20] sm:$0xff]
    %v100 = vld [vmem:[#allocation7 + $0x28] sm:$0xff]
    %v101 = vld [vmem:[#allocation7 + $0x30] sm:$0xff]
    %v102 = vld [vmem:[#allocation7 + $0x38] sm:$0xff]
    %v103 = vld [vmem:[#allocation7 + $0x40] sm:$0xff]
    %v104 = vld [vmem:[#allocation7 + $0x48] sm:$0xff]
    %v105 = vld [vmem:[#allocation7 + $0x50] sm:$0xff]
    %v106 = vld [vmem:[#allocation7 + $0x58] sm:$0xff]
    %v107 = vld [vmem:[#allocation7 + $0x60] sm:$0xff]
    %v108 = vld [vmem:[#allocation7 + $0x68] sm:$0xff]
    %v109 = vld [vmem:[#allocation7 + $0x70] sm:$0xff]
    %v110 = vld [vmem:[#allocation7 + $0x78] sm:$0xff]
    %v111 = vld [vmem:[#allocation7 + $0x80] sm:$0xff]
    %v112 = vld [vmem:[#allocation7 + $0x88] sm:$0xff]
    %v113 = vld [vmem:[#allocation7 + $0x90] sm:$0xff]
    %v114 = vld [vmem:[#allocation7 + $0x98] sm:$0xff]
    %v115 = vld [vmem:[#allocation7 + $0xa0] sm:$0xff]
    %v116 = vld [vmem:[#allocation7 + $0xa8] sm:$0xff]
    %v117 = vld [vmem:[#allocation7 + $0xb0] sm:$0xff]
    %v118 = vld [vmem:[#allocation7 + $0xb8] sm:$0xff]
    %v119 = vld [vmem:[#allocation7 + $0xc0] sm:$0xff]
    %v120 = vld [vmem:[#allocation7 + $0xc8] sm:$0xff]
    %v121 = vld [vmem:[#allocation7 + $0xd0] sm:$0xff]
    %v122 = vld [vmem:[#allocation7 + $0xd8] sm:$0xff]
    %v123 = vld [vmem:[#allocation7 + $0xe0] sm:$0xff]
    %v124 = vld [vmem:[#allocation7 + $0xe8] sm:$0xff]
    %v125 = vld [vmem:[#allocation7 + $0xf0] sm:$0xff]
    %v126 = vld [vmem:[#allocation7 + $0xf8] sm:$0xff]
    %v127 = vld [vmem:[#allocation7 + $0x100] sm:$0xff]
    %v128 = vld [vmem:[#allocation7 + $0x108] sm:$0xff]
    %v129 = vld [vmem:[#allocation7 + $0x110] sm:$0xff]
    %v130 = vld [vmem:[#allocation7 + $0x118] sm:$0xff]
    %v131 = vld [vmem:[#allocation7 + $0x120] sm:$0xff]
    %v132 = vld [vmem:[#allocation7 + $0x128] sm:$0xff]
    %v133 = vld [vmem:[#allocation7 + $0x130] sm:$0xff]
    %v134 = vld [vmem:[#allocation7 + $0x138] sm:$0xff]
    %v135 = vld [vmem:[#allocation7 + $0x140] sm:$0xff]
    %v136 = vld [vmem:[#allocation7 + $0x148] sm:$0xff]
    %v137 = vld [vmem:[#allocation7 + $0x150] sm:$0xff]
    %v138 = vld [vmem:[#allocation7 + $0x158] sm:$0xff]
    %v139 = vld [vmem:[#allocation7 + $0x160] sm:$0xff]
    %v140 = vld [vmem:[#allocation7 + $0x168] sm:$0xff]
    %v141 = vld [vmem:[#allocation7 + $0x170] sm:$0xff]
    %v142 = vld [vmem:[#allocation7 + $0x178] sm:$0xff]
    %v143 = vld [vmem:[#allocation7 + $0x180] sm:$0xff]
    %v144 = vld [vmem:[#allocation7 + $0x188] sm:$0xff]
    %v145 = vld [vmem:[#allocation7 + $0x190] sm:$0xff]
    %v146 = vld [vmem:[#allocation7 + $0x198] sm:$0xff]
    %v147 = vld [vmem:[#allocation7 + $0x1a0] sm:$0xff]
    %v148 = vld [vmem:[#allocation7 + $0x1a8] sm:$0xff]
    %v149 = vld [vmem:[#allocation7 + $0x1b0] sm:$0xff]
    %v150 = vld [vmem:[#allocation7 + $0x1b8] sm:$0xff]
    %v151 = vld [vmem:[#allocation7 + $0x1c0] sm:$0xff]
    %v152 = vld [vmem:[#allocation7 + $0x1c8] sm:$0xff]
    %v153 = vld [vmem:[#allocation7 + $0x1d0] sm:$0xff]
    %v154 = vld [vmem:[#allocation7 + $0x1d8] sm:$0xff]
    %v155 = vld [vmem:[#allocation7 + $0x1e0] sm:$0xff]
    %v156 = vld [vmem:[#allocation7 + $0x1e8] sm:$0xff]
    %v157 = vld [vmem:[#allocation7 + $0x1f0] sm:$0xff]
    %v158 = vld [vmem:[#allocation7 + $0x1f8] sm:$0xff]
    %v159 = vld [vmem:[#allocation9] sm:$0xff]
    %v160 = vld [vmem:[#allocation9 + $0x8] sm:$0xff]
    %v161 = vld [vmem:[#allocation9 + $0x10] sm:$0xff]
    %v162 = vld [vmem:[#allocation9 + $0x18] sm:$0xff]
    %v163 = vld [vmem:[#allocation9 + $0x20] sm:$0xff]
    %v164 = vld [vmem:[#allocation9 + $0x28] sm:$0xff]
    %v165 = vld [vmem:[#allocation9 + $0x30] sm:$0xff]
    %v166 = vld [vmem:[#allocation9 + $0x38] sm:$0xff]
    %v167 = vld [vmem:[#allocation9 + $0x40] sm:$0xff]
    %v168 = vld [vmem:[#allocation9 + $0x48] sm:$0xff]
    %v169 = vld [vmem:[#allocation9 + $0x50] sm:$0xff]
    %v170 = vld [vmem:[#allocation9 + $0x58] sm:$0xff]
    %v171 = vld [vmem:[#allocation9 + $0x60] sm:$0xff]
    %v172 = vld [vmem:[#allocation9 + $0x68] sm:$0xff]
    %v173 = vld [vmem:[#allocation9 + $0x70] sm:$0xff]
    %v174 = vld [vmem:[#allocation9 + $0x78] sm:$0xff]
    %v175 = vld [vmem:[#allocation9 + $0x80] sm:$0xff]
    %v176 = vld [vmem:[#allocation9 + $0x88] sm:$0xff]
    %v177 = vld [vmem:[#allocation9 + $0x90] sm:$0xff]
    %v178 = vld [vmem:[#allocation9 + $0x98] sm:$0xff]
    %v179 = vld [vmem:[#allocation9 + $0xa0] sm:$0xff]
    %v180 = vld [vmem:[#allocation9 + $0xa8] sm:$0xff]
    %v181 = vld [vmem:[#allocation9 + $0xb0] sm:$0xff]
    %v182 = vld [vmem:[#allocation9 + $0xb8] sm:$0xff]
    %v183 = vld [vmem:[#allocation9 + $0xc0] sm:$0xff]
    %v184 = vld [vmem:[#allocation9 + $0xc8] sm:$0xff]
    %v185 = vld [vmem:[#allocation9 + $0xd0] sm:$0xff]
    %v186 = vld [vmem:[#allocation9 + $0xd8] sm:$0xff]
    %v187 = vld [vmem:[#allocation9 + $0xe0] sm:$0xff]
    %v188 = vld [vmem:[#allocation9 + $0xe8] sm:$0xff]
    %v189 = vld [vmem:[#allocation9 + $0xf0] sm:$0xff]
    %v190 = vld [vmem:[#allocation9 + $0xf8] sm:$0xff]
    %v191 = vld [vmem:[#allocation9 + $0x100] sm:$0xff]
    %v192 = vld [vmem:[#allocation9 + $0x108] sm:$0xff]
    %v193 = vld [vmem:[#allocation9 + $0x110] sm:$0xff]
    %v194 = vld [vmem:[#allocation9 + $0x118] sm:$0xff]
    %v195 = vld [vmem:[#allocation9 + $0x120] sm:$0xff]
    %v196 = vld [vmem:[#allocation9 + $0x128] sm:$0xff]
    %v197 = vld [vmem:[#allocation9 + $0x130] sm:$0xff]
    %v198 = vld [vmem:[#allocation9 + $0x138] sm:$0xff]
    %v199 = vld [vmem:[#allocation9 + $0x140] sm:$0xff]
    %v200 = vld [vmem:[#allocation9 + $0x148] sm:$0xff]
    %v201 = vld [vmem:[#allocation9 + $0x150] sm:$0xff]
    %v202 = vld [vmem:[#allocation9 + $0x158] sm:$0xff]
    %v203 = vld [vmem:[#allocation9 + $0x160] sm:$0xff]
    %v204 = vld [vmem:[#allocation9 + $0x168] sm:$0xff]
    %v205 = vld [vmem:[#allocation9 + $0x170] sm:$0xff]
    %v206 = vld [vmem:[#allocation9 + $0x178] sm:$0xff]
    %v207 = vld [vmem:[#allocation9 + $0x180] sm:$0xff]
    %v208 = vld [vmem:[#allocation9 + $0x188] sm:$0xff]
    %v209 = vld [vmem:[#allocation9 + $0x190] sm:$0xff]
    %v210 = vld [vmem:[#allocation9 + $0x198] sm:$0xff]
    %v211 = vld [vmem:[#allocation9 + $0x1a0] sm:$0xff]
    %v212 = vld [vmem:[#allocation9 + $0x1a8] sm:$0xff]
    %v213 = vld [vmem:[#allocation9 + $0x1b0] sm:$0xff]
    %v214 = vld [vmem:[#allocation9 + $0x1b8] sm:$0xff]
    %v215 = vld [vmem:[#allocation9 + $0x1c0] sm:$0xff]
    %v216 = vld [vmem:[#allocation9 + $0x1c8] sm:$0xff]
    %v217 = vld [vmem:[#allocation9 + $0x1d0] sm:$0xff]
    %v218 = vld [vmem:[#allocation9 + $0x1d8] sm:$0xff]
    %v219 = vld [vmem:[#allocation9 + $0x1e0] sm:$0xff]
    %v220 = vld [vmem:[#allocation9 + $0x1e8] sm:$0xff]
    %v221 = vld [vmem:[#allocation9 + $0x1f0] sm:$0xff]
    %v222 = vld [vmem:[#allocation9 + $0x1f8] sm:$0xff]
    %223 = vmatprep.subr.mxu0 %v156
    %224 = vmatpush1.xpose.msra.mxu0 %v155
    %225 = vmatprep.subr.mxu0 %v152
    %226 = vmatpush1.xpose.msra.mxu0 %v151
    %227 = vmatprep.subr.mxu0 %v148
    %228 = vmatpush1.xpose.msra.mxu0 %v147
    %229 = vmatprep.subr.mxu0 %v144
    %230 = vmatpush1.xpose.msra.mxu0 %v143
    %231 = vmatprep.subr.mxu0 %v140
    %232 = vmatpush1.xpose.msra.mxu0 %v139
    %233 = vmatprep.subr.mxu0 %v136
    %234 = vmatpush1.xpose.msra.mxu0 %v135
    %235 = vmatprep.subr.mxu0 %v132
    %236 = vmatpush1.xpose.msra.mxu0 %v131
    %237 = vmatprep.subr.mxu0 %v128
    %238 = vmatpush1.xpose.msra.mxu0 %v127
    %239 = vmatprep.subr.mxu0 %v124
    %240 = vmatpush1.xpose.msra.mxu0 %v123
    %241 = vmatprep.subr.mxu0 %v120
    %242 = vmatpush1.xpose.msra.mxu0 %v119
    %243 = vmatprep.subr.mxu0 %v116
    %244 = vmatpush1.xpose.msra.mxu0 %v115
    %245 = vmatprep.subr.mxu0 %v112
    %246 = vmatpush1.xpose.msra.mxu0 %v111
    %247 = vmatprep.subr.mxu0 %v108
    %248 = vmatpush1.xpose.msra.mxu0 %v107
    %249 = vmatprep.subr.mxu0 %v104
    %250 = vmatpush1.xpose.msra.mxu0 %v103
    %251 = vmatprep.subr.mxu0 %v100
    %252 = vmatpush1.xpose.msra.mxu0 %v99
    %253 = vmatprep.subr.mxu0 %v96
    %254 = vmatpush1.xpose.msra.mxu0 %v95
    %255 = vmatprep.subr.mxu0 0.0
    %256 = vmatpush2.xpose.msra.mxu0 0.0
    %257 = vmatprep.subr.mxu0 0.0
    %258 = vmatpush2.xpose.msra.mxu0 0.0
    %259 = vmatprep.subr.mxu0 0.0
    %260 = vmatpush2.xpose.msra.mxu0 0.0
    %261 = vmatprep.subr.mxu0 0.0
    %262 = vmatpush2.xpose.msra.mxu0 0.0
    %263 = vmatprep.subr.mxu0 0.0
    %264 = vmatpush2.xpose.msra.mxu0 0.0
    %265 = vmatprep.subr.mxu0 0.0
    %266 = vmatpush2.xpose.msra.mxu0 0.0
    %267 = vmatprep.subr.mxu0 0.0
    %268 = vmatpush2.xpose.msra.mxu0 0.0
    %269 = vmatprep.subr.mxu0 0.0
    %270 = vmatpush2.xpose.msra.mxu0 0.0
    %271 = vmatprep.subr.mxu0 0.0
    %272 = vmatpush2.xpose.msra.mxu0 0.0
    %273 = vmatprep.subr.mxu0 0.0
    %274 = vmatpush2.xpose.msra.mxu0 0.0
    %275 = vmatprep.subr.mxu0 0.0
    %276 = vmatpush2.xpose.msra.mxu0 0.0
    %277 = vmatprep.subr.mxu0 0.0
    %278 = vmatpush2.xpose.msra.mxu0 0.0
    %279 = vmatprep.subr.mxu0 0.0
    %280 = vmatpush2.xpose.msra.mxu0 0.0
    %281 = vmatprep.subr.mxu0 0.0
    %282 = vmatpush2.xpose.msra.mxu0 0.0
    %283 = vmatprep.subr.mxu0 0.0
    %284 = vmatpush2.xpose.msra.mxu0 0.0
    %285 = vmatprep.subr.mxu0 0.0
    %286 = vmatpush2.xpose.msra.mxu0 0.0
    %287 = vmatprep.mubr.f32.mxu0 %v92
    %288 = vmatmul.mubr.f32.gmra.mxu0 %v91
    %v289 = vpop.f32.mrf.mxu0
    %v290 = vadd.f32 0.0, %v289
    %v291 = vpop.f32.mrf.mxu0
    %292 = vdwg.mxu0
    %293 = vmatprep.subr.mxu0 %v158
    %294 = vmatpush1.xpose.msra.mxu0 %v157
    %295 = vmatprep.subr.mxu0 %v154
    %296 = vmatpush1.xpose.msra.mxu0 %v153
    %297 = vmatprep.subr.mxu0 %v150
    %298 = vmatpush1.xpose.msra.mxu0 %v149
    %299 = vmatprep.subr.mxu0 %v146
    %300 = vmatpush1.xpose.msra.mxu0 %v145
    %301 = vmatprep.subr.mxu0 %v142
    %302 = vmatpush1.xpose.msra.mxu0 %v141
    %303 = vmatprep.subr.mxu0 %v138
    %304 = vmatpush1.xpose.msra.mxu0 %v137
    %305 = vmatprep.subr.mxu0 %v134
    %306 = vmatpush1.xpose.msra.mxu0 %v133
    %307 = vmatprep.subr.mxu0 %v130
    %308 = vmatpush1.xpose.msra.mxu0 %v129
    %309 = vmatprep.subr.mxu0 %v126
    %310 = vmatpush1.xpose.msra.mxu0 %v125
    %311 = vmatprep.subr.mxu0 %v122
    %312 = vmatpush1.xpose.msra.mxu0 %v121
    %313 = vmatprep.subr.mxu0 %v118
    %314 = vmatpush1.xpose.msra.mxu0 %v117
    %315 = vmatprep.subr.mxu0 %v114
    %316 = vmatpush1.xpose.msra.mxu0 %v113
    %317 = vmatprep.subr.mxu0 %v110
    %318 = vmatpush1.xpose.msra.mxu0 %v109
    %319 = vmatprep.subr.mxu0 %v106
    %320 = vmatpush1.xpose.msra.mxu0 %v105
    %321 = vmatprep.subr.mxu0 %v102
    %322 = vmatpush1.xpose.msra.mxu0 %v101
    %323 = vmatprep.subr.mxu0 %v98
    %324 = vmatpush1.xpose.msra.mxu0 %v97
    %325 = vmatprep.subr.mxu0 0.0
    %326 = vmatpush2.xpose.msra.mxu0 0.0
    %327 = vmatprep.subr.mxu0 0.0
    %328 = vmatpush2.xpose.msra.mxu0 0.0
    %329 = vmatprep.subr.mxu0 0.0
    %330 = vmatpush2.xpose.msra.mxu0 0.0
    %331 = vmatprep.subr.mxu0 0.0
    %332 = vmatpush2.xpose.msra.mxu0 0.0
    %333 = vmatprep.subr.mxu0 0.0
    %334 = vmatpush2.xpose.msra.mxu0 0.0
    %335 = vmatprep.subr.mxu0 0.0
    %336 = vmatpush2.xpose.msra.mxu0 0.0
    %337 = vmatprep.subr.mxu0 0.0
    %338 = vmatpush2.xpose.msra.mxu0 0.0
    %339 = vmatprep.subr.mxu0 0.0
    %340 = vmatpush2.xpose.msra.mxu0 0.0
    %341 = vmatprep.subr.mxu0 0.0
    %342 = vmatpush2.xpose.msra.mxu0 0.0
    %343 = vmatprep.subr.mxu0 0.0
    %344 = vmatpush2.xpose.msra.mxu0 0.0
    %345 = vmatprep.subr.mxu0 0.0
    %346 = vmatpush2.xpose.msra.mxu0 0.0
    %347 = vmatprep.subr.mxu0 0.0
    %348 = vmatpush2.xpose.msra.mxu0 0.0
    %349 = vmatprep.subr.mxu0 0.0
    %350 = vmatpush2.xpose.msra.mxu0 0.0
    %351 = vmatprep.subr.mxu0 0.0
    %352 = vmatpush2.xpose.msra.mxu0 0.0
    %353 = vmatprep.subr.mxu0 0.0
    %354 = vmatpush2.xpose.msra.mxu0 0.0
    %355 = vmatprep.subr.mxu0 0.0
    %356 = vmatpush2.xpose.msra.mxu0 0.0
    %357 = vmatprep.mubr.f32.mxu0 %v94
    %358 = vmatmul.mubr.f32.gmra.mxu0 %v93
    %v359 = vpop.f32.mrf.mxu0
    %v360 = vadd.f32 %v290, %v359
    %v361 = vpop.f32.mrf.mxu0
    %362 = vdwg.mxu0
    %363 = vmatprep.subr.mxu0 %v220
    %364 = vmatpush1.xpose.msra.mxu0 %v219
    %365 = vmatprep.subr.mxu0 %v216
    %366 = vmatpush1.xpose.msra.mxu0 %v215
    %367 = vmatprep.subr.mxu0 %v212
    %368 = vmatpush1.xpose.msra.mxu0 %v211
    %369 = vmatprep.subr.mxu0 %v208
    %370 = vmatpush1.xpose.msra.mxu0 %v207
    %371 = vmatprep.subr.mxu0 %v204
    %372 = vmatpush1.xpose.msra.mxu0 %v203
    %373 = vmatprep.subr.mxu0 %v200
    %374 = vmatpush1.xpose.msra.mxu0 %v199
    %375 = vmatprep.subr.mxu0 %v196
    %376 = vmatpush1.xpose.msra.mxu0 %v195
    %377 = vmatprep.subr.mxu0 %v192
    %378 = vmatpush1.xpose.msra.mxu0 %v191
    %379 = vmatprep.subr.mxu0 %v188
    %380 = vmatpush1.xpose.msra.mxu0 %v187
    %381 = vmatprep.subr.mxu0 %v184
    %382 = vmatpush1.xpose.msra.mxu0 %v183
    %383 = vmatprep.subr.mxu0 %v180
    %384 = vmatpush1.xpose.msra.mxu0 %v179
    %385 = vmatprep.subr.mxu0 %v176
    %386 = vmatpush1.xpose.msra.mxu0 %v175
    %387 = vmatprep.subr.mxu0 %v172
    %388 = vmatpush1.xpose.msra.mxu0 %v171
    %389 = vmatprep.subr.mxu0 %v168
    %390 = vmatpush1.xpose.msra.mxu0 %v167
    %391 = vmatprep.subr.mxu0 %v164
    %392 = vmatpush1.xpose.msra.mxu0 %v163
    %393 = vmatprep.subr.mxu0 %v160
    %394 = vmatpush1.xpose.msra.mxu0 %v159
    %395 = vmatprep.subr.mxu0 0.0
    %396 = vmatpush2.xpose.msra.mxu0 0.0
    %397 = vmatprep.subr.mxu0 0.0
    %398 = vmatpush2.xpose.msra.mxu0 0.0
    %399 = vmatprep.subr.mxu0 0.0
    %400 = vmatpush2.xpose.msra.mxu0 0.0
    %401 = vmatprep.subr.mxu0 0.0
    %402 = vmatpush2.xpose.msra.mxu0 0.0
    %403 = vmatprep.subr.mxu0 0.0
    %404 = vmatpush2.xpose.msra.mxu0 0.0
    %405 = vmatprep.subr.mxu0 0.0
    %406 = vmatpush2.xpose.msra.mxu0 0.0
    %407 = vmatprep.subr.mxu0 0.0
    %408 = vmatpush2.xpose.msra.mxu0 0.0
    %409 = vmatprep.subr.mxu0 0.0
    %410 = vmatpush2.xpose.msra.mxu0 0.0
    %411 = vmatprep.subr.mxu0 0.0
    %412 = vmatpush2.xpose.msra.mxu0 0.0
    %413 = vmatprep.subr.mxu0 0.0
    %414 = vmatpush2.xpose.msra.mxu0 0.0
    %415 = vmatprep.subr.mxu0 0.0
    %416 = vmatpush2.xpose.msra.mxu0 0.0
    %417 = vmatprep.subr.mxu0 0.0
    %418 = vmatpush2.xpose.msra.mxu0 0.0
    %419 = vmatprep.subr.mxu0 0.0
    %420 = vmatpush2.xpose.msra.mxu0 0.0
    %421 = vmatprep.subr.mxu0 0.0
    %422 = vmatpush2.xpose.msra.mxu0 0.0
    %423 = vmatprep.subr.mxu0 0.0
    %424 = vmatpush2.xpose.msra.mxu0 0.0
    %425 = vmatprep.subr.mxu0 0.0
    %426 = vmatpush2.xpose.msra.mxu0 0.0
    %427 = vmatprep.mubr.f32.mxu0 %v92
    %428 = vmatmul.mubr.f32.gmra.mxu0 %v91
    %v429 = vpop.f32.mrf.mxu0
    %v430 = vadd.f32 0.0, %v429
    %v431 = vpop.f32.mrf.mxu0
    %432 = vdwg.mxu0
    %433 = vmatprep.subr.mxu0 %v222
    %434 = vmatpush1.xpose.msra.mxu0 %v221
    %435 = vmatprep.subr.mxu0 %v218
    %436 = vmatpush1.xpose.msra.mxu0 %v217
    %437 = vmatprep.subr.mxu0 %v214
    %438 = vmatpush1.xpose.msra.mxu0 %v213
    %439 = vmatprep.subr.mxu0 %v210
    %440 = vmatpush1.xpose.msra.mxu0 %v209
    %441 = vmatprep.subr.mxu0 %v206
    %442 = vmatpush1.xpose.msra.mxu0 %v205
    %443 = vmatprep.subr.mxu0 %v202
    %444 = vmatpush1.xpose.msra.mxu0 %v201
    %445 = vmatprep.subr.mxu0 %v198
    %446 = vmatpush1.xpose.msra.mxu0 %v197
    %447 = vmatprep.subr.mxu0 %v194
    %448 = vmatpush1.xpose.msra.mxu0 %v193
    %449 = vmatprep.subr.mxu0 %v190
    %450 = vmatpush1.xpose.msra.mxu0 %v189
    %451 = vmatprep.subr.mxu0 %v186
    %452 = vmatpush1.xpose.msra.mxu0 %v185
    %453 = vmatprep.subr.mxu0 %v182
    %454 = vmatpush1.xpose.msra.mxu0 %v181
    %455 = vmatprep.subr.mxu0 %v178
    %456 = vmatpush1.xpose.msra.mxu0 %v177
    %457 = vmatprep.subr.mxu0 %v174
    %458 = vmatpush1.xpose.msra.mxu0 %v173
    %459 = vmatprep.subr.mxu0 %v170
    %460 = vmatpush1.xpose.msra.mxu0 %v169
    %461 = vmatprep.subr.mxu0 %v166
    %462 = vmatpush1.xpose.msra.mxu0 %v165
    %463 = vmatprep.subr.mxu0 %v162
    %464 = vmatpush1.xpose.msra.mxu0 %v161
    %465 = vmatprep.subr.mxu0 0.0
    %466 = vmatpush2.xpose.msra.mxu0 0.0
    %467 = vmatprep.subr.mxu0 0.0
    %468 = vmatpush2.xpose.msra.mxu0 0.0
    %469 = vmatprep.subr.mxu0 0.0
    %470 = vmatpush2.xpose.msra.mxu0 0.0
    %471 = vmatprep.subr.mxu0 0.0
    %472 = vmatpush2.xpose.msra.mxu0 0.0
    %473 = vmatprep.subr.mxu0 0.0
    %474 = vmatpush2.xpose.msra.mxu0 0.0
    %475 = vmatprep.subr.mxu0 0.0
    %476 = vmatpush2.xpose.msra.mxu0 0.0
    %477 = vmatprep.subr.mxu0 0.0
    %478 = vmatpush2.xpose.msra.mxu0 0.0
    %479 = vmatprep.subr.mxu0 0.0
    %480 = vmatpush2.xpose.msra.mxu0 0.0
    %481 = vmatprep.subr.mxu0 0.0
    %482 = vmatpush2.xpose.msra.mxu0 0.0
    %483 = vmatprep.subr.mxu0 0.0
    %484 = vmatpush2.xpose.msra.mxu0 0.0
    %485 = vmatprep.subr.mxu0 0.0
    %486 = vmatpush2.xpose.msra.mxu0 0.0
    %487 = vmatprep.subr.mxu0 0.0
    %488 = vmatpush2.xpose.msra.mxu0 0.0
    %489 = vmatprep.subr.mxu0 0.0
    %490 = vmatpush2.xpose.msra.mxu0 0.0
    %491 = vmatprep.subr.mxu0 0.0
    %492 = vmatpush2.xpose.msra.mxu0 0.0
    %493 = vmatprep.subr.mxu0 0.0
    %494 = vmatpush2.xpose.msra.mxu0 0.0
    %495 = vmatprep.subr.mxu0 0.0
    %496 = vmatpush2.xpose.msra.mxu0 0.0
    %497 = vmatprep.mubr.f32.mxu0 %v94
    %498 = vmatmul.mubr.f32.gmra.mxu0 %v93
    %v499 = vpop.f32.mrf.mxu0
    %v500 = vadd.f32 %v430, %v499
    %v501 = vpop.f32.mrf.mxu0
    %502 = vdwg.mxu0
    %v503 = vld [vmem:[#allocation10] sm:$0xf]
    %v504 = vld [vmem:[#allocation10 + $0x4] sm:$0xf]
    %v505 = vld [vmem:[#allocation10 + $0x8] sm:$0xf]
    %v506 = vld [vmem:[#allocation10 + $0xc] sm:$0xf]
    %v507 = vld [vmem:[%s4] sm:$0xf]
    %v508 = vld [vmem:[%s4 + $0x4] sm:$0xf]
    %v509 = vld [vmem:[%s4 + $0x8] sm:$0xf]
    %v510 = vld [vmem:[%s4 + $0xc] sm:$0xf]
    %v513 = vunpack.c.l.s4 1966171168
    %v514 = vunpack.c.0.s8 %v513
    %v515 = vlaneseq
    %v516 = vshrl.u32 %v515, 7
    %v517 = vsub.s32 %v514, %v516
    %v518 = vrot.slane %v360, %v517
    %v519 = vcombine.high %v518, %v518
    %v521 = vunpack.c.l.s4 1966171168
    %v522 = vunpack.c.0.s8 %v521
    %v523 = vlaneseq
    %v524 = vshrl.u32 %v523, 7
    %v525 = vsub.s32 %v522, %v524
    %v526 = vrot.slane %v518, %v525
    %v528 = vunpack.c.l.s4 1966171168
    %v529 = vunpack.c.0.s8 %v528
    %v530 = vlaneseq
    %v531 = vshrl.u32 %v530, 7
    %v532 = vsub.s32 %v529, %v531
    %v533 = vrot.slane %v519, %v532
    %v534 = vcombine.high %v526, %v526
    %v535 = vcombine.high %v533, %v533
    %v536 = vlaneseq
    %v537 = vshrl.u32 %v536, 7
    %v538 = vsub.s32 0, %v537
    %v539 = vrot.slane %v526, %v538
    %v540 = vlaneseq
    %v541 = vshrl.u32 %v540, 7
    %v542 = vsub.s32 0, %v541
    %v543 = vrot.slane %v533, %v542
    %v544 = vlaneseq
    %v545 = vshrl.u32 %v544, 7
    %v546 = vsub.s32 0, %v545
    %v547 = vrot.slane %v534, %v546
    %v548 = vlaneseq
    %v549 = vshrl.u32 %v548, 7
    %v550 = vsub.s32 0, %v549
    %v551 = vrot.slane %v535, %v550
    %v556 = vmul.f32 %v539, %v503
    %v557 = vmul.f32 %v543, %v504
    %v558 = vmul.f32 %v547, %v505
    %v559 = vmul.f32 %v551, %v506
    %v562 = vunpack.c.l.s4 1966171168
    %v563 = vunpack.c.0.s8 %v562
    %v564 = vlaneseq
    %v565 = vshrl.u32 %v564, 7
    %v566 = vsub.s32 %v563, %v565
    %v567 = vrot.slane %v500, %v566
    %v568 = vcombine.high %v567, %v567
    %v570 = vunpack.c.l.s4 1966171168
    %v571 = vunpack.c.0.s8 %v570
    %v572 = vlaneseq
    %v573 = vshrl.u32 %v572, 7
    %v574 = vsub.s32 %v571, %v573
    %v575 = vrot.slane %v567, %v574
    %v577 = vunpack.c.l.s4 1966171168
    %v578 = vunpack.c.0.s8 %v577
    %v579 = vlaneseq
    %v580 = vshrl.u32 %v579, 7
    %v581 = vsub.s32 %v578, %v580
    %v582 = vrot.slane %v568, %v581
    %v583 = vcombine.high %v575, %v575
    %v584 = vcombine.high %v582, %v582
    %v585 = vlaneseq
    %v586 = vshrl.u32 %v585, 7
    %v587 = vsub.s32 0, %v586
    %v588 = vrot.slane %v575, %v587
    %v589 = vlaneseq
    %v590 = vshrl.u32 %v589, 7
    %v591 = vsub.s32 0, %v590
    %v592 = vrot.slane %v582, %v591
    %v593 = vlaneseq
    %v594 = vshrl.u32 %v593, 7
    %v595 = vsub.s32 0, %v594
    %v596 = vrot.slane %v583, %v595
    %v597 = vlaneseq
    %v598 = vshrl.u32 %v597, 7
    %v599 = vsub.s32 0, %v598
    %v600 = vrot.slane %v584, %v599
    %v605 = vmul.f32 %v588, %v507
    %v606 = vmul.f32 %v592, %v508
    %v607 = vmul.f32 %v596, %v509
    %v608 = vmul.f32 %v600, %v510
    %v609 = vsub.f32 %v556, %v605
    %v610 = vsub.f32 %v557, %v606
    %v611 = vsub.f32 %v558, %v607
    %v612 = vsub.f32 %v559, %v608
    %vm613 = vcmask 1043456
    %v614 = vsel %vm613, %v609, 0.0
    %v615 = vsel %vm613, %v610, 0.0
    %v616 = vadd.f32 %v614, %v615
    %v617 = vsel %vm613, %v611, 0.0
    %v618 = vadd.f32 %v616, %v617
    %v619 = vsel %vm613, %v612, 0.0
    %v620 = vadd.f32 %v618, %v619
    %621 = vst [vmem:[#allocation2] sm:$0xf] %v620
    %v622 = vmul.f32 %v539, %v507
    %v623 = vmul.f32 %v543, %v508
    %v624 = vmul.f32 %v547, %v509
    %v625 = vmul.f32 %v551, %v510
    %v626 = vmul.f32 %v588, %v503
    %v627 = vmul.f32 %v592, %v504
    %v628 = vmul.f32 %v596, %v505
    %v629 = vmul.f32 %v600, %v506
    %v630 = vadd.f32 %v622, %v626
    %v631 = vadd.f32 %v623, %v627
    %v632 = vadd.f32 %v624, %v628
    %v633 = vadd.f32 %v625, %v629
    %v634 = vsel %vm613, %v630, 0.0
    %v635 = vsel %vm613, %v631, 0.0
    %v636 = vadd.f32 %v634, %v635
    %v637 = vsel %vm613, %v632, 0.0
    %v638 = vadd.f32 %v636, %v637
    %v639 = vsel %vm613, %v633, 0.0
    %v640 = vadd.f32 %v638, %v639
    %641 = vst [vmem:[#allocation3] sm:$0xf] %v640
    %v642 = vcombine.high %v360, %v360
    %v644 = vunpack.c.l.s4 1966171168
    %v645 = vunpack.c.0.s8 %v644
    %v646 = vlaneseq
    %v647 = vshrl.u32 %v646, 7
    %v648 = vsub.s32 %v645, %v647
    %v649 = vrot.slane %v642, %v648
    %v650 = vcombine.high %v649, %v649
    %v652 = vunpack.c.l.s4 1966171168
    %v653 = vunpack.c.0.s8 %v652
    %v654 = vlaneseq
    %v655 = vshrl.u32 %v654, 7
    %v656 = vsub.s32 %v653, %v655
    %v657 = vrot.slane %v649, %v656
    %v659 = vunpack.c.l.s4 1966171168
    %v660 = vunpack.c.0.s8 %v659
    %v661 = vlaneseq
    %v662 = vshrl.u32 %v661, 7
    %v663 = vsub.s32 %v660, %v662
    %v664 = vrot.slane %v650, %v663
    %v665 = vcombine.high %v657, %v657
    %v666 = vcombine.high %v664, %v664
    %v667 = vlaneseq
    %v668 = vshrl.u32 %v667, 7
    %v669 = vsub.s32 0, %v668
    %v670 = vrot.slane %v657, %v669
    %v671 = vlaneseq
    %v672 = vshrl.u32 %v671, 7
    %v673 = vsub.s32 0, %v672
    %v674 = vrot.slane %v664, %v673
    %v675 = vlaneseq
    %v676 = vshrl.u32 %v675, 7
    %v677 = vsub.s32 0, %v676
    %v678 = vrot.slane %v665, %v677
    %v679 = vlaneseq
    %v680 = vshrl.u32 %v679, 7
    %v681 = vsub.s32 0, %v680
    %v682 = vrot.slane %v666, %v681
    %v687 = vmul.f32 %v670, %v503
    %v688 = vmul.f32 %v674, %v504
    %v689 = vmul.f32 %v678, %v505
    %v690 = vmul.f32 %v682, %v506
    %v691 = vcombine.high %v500, %v500
    %v693 = vunpack.c.l.s4 1966171168
    %v694 = vunpack.c.0.s8 %v693
    %v695 = vlaneseq
    %v696 = vshrl.u32 %v695, 7
    %v697 = vsub.s32 %v694, %v696
    %v698 = vrot.slane %v691, %v697
    %v699 = vcombine.high %v698, %v698
    %v701 = vunpack.c.l.s4 1966171168
    %v702 = vunpack.c.0.s8 %v701
    %v703 = vlaneseq
    %v704 = vshrl.u32 %v703, 7
    %v705 = vsub.s32 %v702, %v704
    %v706 = vrot.slane %v698, %v705
    %v708 = vunpack.c.l.s4 1966171168
    %v709 = vunpack.c.0.s8 %v708
    %v710 = vlaneseq
    %v711 = vshrl.u32 %v710, 7
    %v712 = vsub.s32 %v709, %v711
    %v713 = vrot.slane %v699, %v712
    %v714 = vcombine.high %v706, %v706
    %v715 = vcombine.high %v713, %v713
    %v716 = vlaneseq
    %v717 = vshrl.u32 %v716, 7
    %v718 = vsub.s32 0, %v717
    %v719 = vrot.slane %v706, %v718
    %v720 = vlaneseq
    %v721 = vshrl.u32 %v720, 7
    %v722 = vsub.s32 0, %v721
    %v723 = vrot.slane %v713, %v722
    %v724 = vlaneseq
    %v725 = vshrl.u32 %v724, 7
    %v726 = vsub.s32 0, %v725
    %v727 = vrot.slane %v714, %v726
    %v728 = vlaneseq
    %v729 = vshrl.u32 %v728, 7
    %v730 = vsub.s32 0, %v729
    %v731 = vrot.slane %v715, %v730
    %v736 = vmul.f32 %v719, %v507
    %v737 = vmul.f32 %v723, %v508
    %v738 = vmul.f32 %v727, %v509
    %v739 = vmul.f32 %v731, %v510
    %v740 = vsub.f32 %v687, %v736
    %v741 = vsub.f32 %v688, %v737
    %v742 = vsub.f32 %v689, %v738
    %v743 = vsub.f32 %v690, %v739
    %v744 = vsel %vm613, %v740, 0.0
    %v745 = vsel %vm613, %v741, 0.0
    %v746 = vadd.f32 %v744, %v745
    %v747 = vsel %vm613, %v742, 0.0
    %v748 = vadd.f32 %v746, %v747
    %v749 = vsel %vm613, %v743, 0.0
    %v750 = vadd.f32 %v748, %v749
    %751 = vst [vmem:[#allocation2 + $0x4] sm:$0xf] %v750
    %v752 = vmul.f32 %v670, %v507
    %v753 = vmul.f32 %v674, %v508
    %v754 = vmul.f32 %v678, %v509
    %v755 = vmul.f32 %v682, %v510
    %v756 = vmul.f32 %v719, %v503
    %v757 = vmul.f32 %v723, %v504
    %v758 = vmul.f32 %v727, %v505
    %v759 = vmul.f32 %v731, %v506
    %v760 = vadd.f32 %v752, %v756
    %v761 = vadd.f32 %v753, %v757
    %v762 = vadd.f32 %v754, %v758
    %v763 = vadd.f32 %v755, %v759
    %v764 = vsel %vm613, %v760, 0.0
    %v765 = vsel %vm613, %v761, 0.0
    %v766 = vadd.f32 %v764, %v765
    %v767 = vsel %vm613, %v762, 0.0
    %v768 = vadd.f32 %v766, %v767
    %v769 = vsel %vm613, %v763, 0.0
    %v770 = vadd.f32 %v768, %v769
    %771 = vst [vmem:[#allocation3 + $0x4] sm:$0xf] %v770
    %v772 = vld [vmem:[#allocation2] sm:$0xff]
    %v773 = vld [vmem:[#allocation3] sm:$0xff]
    %774 = vmatprep.subr.mxu0 %v220
    %775 = vmatpush1.msra.mxu0 %v219
    %776 = vmatprep.subr.mxu0 %v216
    %777 = vmatpush1.msra.mxu0 %v215
    %778 = vmatprep.subr.mxu0 %v212
    %779 = vmatpush1.msra.mxu0 %v211
    %780 = vmatprep.subr.mxu0 %v208
    %781 = vmatpush1.msra.mxu0 %v207
    %782 = vmatprep.subr.mxu0 %v204
    %783 = vmatpush1.msra.mxu0 %v203
    %784 = vmatprep.subr.mxu0 %v200
    %785 = vmatpush1.msra.mxu0 %v199
    %786 = vmatprep.subr.mxu0 %v196
    %787 = vmatpush1.msra.mxu0 %v195
    %788 = vmatprep.subr.mxu0 %v192
    %789 = vmatpush1.msra.mxu0 %v191
    %790 = vmatprep.subr.mxu0 %v188
    %791 = vmatpush1.msra.mxu0 %v187
    %792 = vmatprep.subr.mxu0 %v184
    %793 = vmatpush1.msra.mxu0 %v183
    %794 = vmatprep.subr.mxu0 %v180
    %795 = vmatpush1.msra.mxu0 %v179
    %796 = vmatprep.subr.mxu0 %v176
    %797 = vmatpush1.msra.mxu0 %v175
    %798 = vmatprep.subr.mxu0 %v172
    %799 = vmatpush1.msra.mxu0 %v171
    %800 = vmatprep.subr.mxu0 %v168
    %801 = vmatpush1.msra.mxu0 %v167
    %802 = vmatprep.subr.mxu0 %v164
    %803 = vmatpush1.msra.mxu0 %v163
    %804 = vmatprep.subr.mxu0 %v160
    %805 = vmatpush1.msra.mxu0 %v159
    %806 = vmatprep.subr.mxu0 0.0
    %807 = vmatpush2.msra.mxu0 0.0
    %808 = vmatprep.subr.mxu0 0.0
    %809 = vmatpush2.msra.mxu0 0.0
    %810 = vmatprep.subr.mxu0 0.0
    %811 = vmatpush2.msra.mxu0 0.0
    %812 = vmatprep.subr.mxu0 0.0
    %813 = vmatpush2.msra.mxu0 0.0
    %814 = vmatprep.subr.mxu0 0.0
    %815 = vmatpush2.msra.mxu0 0.0
    %816 = vmatprep.subr.mxu0 0.0
    %817 = vmatpush2.msra.mxu0 0.0
    %818 = vmatprep.subr.mxu0 0.0
    %819 = vmatpush2.msra.mxu0 0.0
    %820 = vmatprep.subr.mxu0 0.0
    %821 = vmatpush2.msra.mxu0 0.0
    %822 = vmatprep.subr.mxu0 0.0
    %823 = vmatpush2.msra.mxu0 0.0
    %824 = vmatprep.subr.mxu0 0.0
    %825 = vmatpush2.msra.mxu0 0.0
    %826 = vmatprep.subr.mxu0 0.0
    %827 = vmatpush2.msra.mxu0 0.0
    %828 = vmatprep.subr.mxu0 0.0
    %829 = vmatpush2.msra.mxu0 0.0
    %830 = vmatprep.subr.mxu0 0.0
    %831 = vmatpush2.msra.mxu0 0.0
    %832 = vmatprep.subr.mxu0 0.0
    %833 = vmatpush2.msra.mxu0 0.0
    %834 = vmatprep.subr.mxu0 0.0
    %835 = vmatpush2.msra.mxu0 0.0
    %836 = vmatprep.subr.mxu0 0.0
    %837 = vmatpush2.msra.mxu0 0.0
    %838 = vmatprep.mubr.f32.mxu0 0.0
    %839 = vmatmul.mubr.f32.gmra.mxu0 %v773
    %v840 = vpop.f32.mrf.mxu0
    %v841 = vadd.f32 0.0, %v840
    %v842 = vpop.f32.mrf.mxu0
    %v843 = vadd.f32 0.0, %v842
    %844 = vdwg.mxu0
    %845 = vmatprep.subr.mxu0 %v222
    %846 = vmatpush1.msra.mxu0 %v221
    %847 = vmatprep.subr.mxu0 %v218
    %848 = vmatpush1.msra.mxu0 %v217
    %849 = vmatprep.subr.mxu0 %v214
    %850 = vmatpush1.msra.mxu0 %v213
    %851 = vmatprep.subr.mxu0 %v210
    %852 = vmatpush1.msra.mxu0 %v209
    %853 = vmatprep.subr.mxu0 %v206
    %854 = vmatpush1.msra.mxu0 %v205
    %855 = vmatprep.subr.mxu0 %v202
    %856 = vmatpush1.msra.mxu0 %v201
    %857 = vmatprep.subr.mxu0 %v198
    %858 = vmatpush1.msra.mxu0 %v197
    %859 = vmatprep.subr.mxu0 %v194
    %860 = vmatpush1.msra.mxu0 %v193
    %861 = vmatprep.subr.mxu0 %v190
    %862 = vmatpush1.msra.mxu0 %v189
    %863 = vmatprep.subr.mxu0 %v186
    %864 = vmatpush1.msra.mxu0 %v185
    %865 = vmatprep.subr.mxu0 %v182
    %866 = vmatpush1.msra.mxu0 %v181
    %867 = vmatprep.subr.mxu0 %v178
    %868 = vmatpush1.msra.mxu0 %v177
    %869 = vmatprep.subr.mxu0 %v174
    %870 = vmatpush1.msra.mxu0 %v173
    %871 = vmatprep.subr.mxu0 %v170
    %872 = vmatpush1.msra.mxu0 %v169
    %873 = vmatprep.subr.mxu0 %v166
    %874 = vmatpush1.msra.mxu0 %v165
    %875 = vmatprep.subr.mxu0 %v162
    %876 = vmatpush1.msra.mxu0 %v161
    %877 = vmatprep.subr.mxu0 0.0
    %878 = vmatpush2.msra.mxu0 0.0
    %879 = vmatprep.subr.mxu0 0.0
    %880 = vmatpush2.msra.mxu0 0.0
    %881 = vmatprep.subr.mxu0 0.0
    %882 = vmatpush2.msra.mxu0 0.0
    %883 = vmatprep.subr.mxu0 0.0
    %884 = vmatpush2.msra.mxu0 0.0
    %885 = vmatprep.subr.mxu0 0.0
    %886 = vmatpush2.msra.mxu0 0.0
    %887 = vmatprep.subr.mxu0 0.0
    %888 = vmatpush2.msra.mxu0 0.0
    %889 = vmatprep.subr.mxu0 0.0
    %890 = vmatpush2.msra.mxu0 0.0
    %891 = vmatprep.subr.mxu0 0.0
    %892 = vmatpush2.msra.mxu0 0.0
    %893 = vmatprep.subr.mxu0 0.0
    %894 = vmatpush2.msra.mxu0 0.0
    %895 = vmatprep.subr.mxu0 0.0
    %896 = vmatpush2.msra.mxu0 0.0
    %897 = vmatprep.subr.mxu0 0.0
    %898 = vmatpush2.msra.mxu0 0.0
    %899 = vmatprep.subr.mxu0 0.0
    %900 = vmatpush2.msra.mxu0 0.0
    %901 = vmatprep.subr.mxu0 0.0
    %902 = vmatpush2.msra.mxu0 0.0
    %903 = vmatprep.subr.mxu0 0.0
    %904 = vmatpush2.msra.mxu0 0.0
    %905 = vmatprep.subr.mxu0 0.0
    %906 = vmatpush2.msra.mxu0 0.0
    %907 = vmatprep.subr.mxu0 0.0
    %908 = vmatpush2.msra.mxu0 0.0
    %909 = vmatprep.mubr.f32.mxu0 0.0
    %910 = vmatmul.mubr.f32.gmra.mxu0 %v773
    %v911 = vpop.f32.mrf.mxu0
    %v912 = vadd.f32 0.0, %v911
    %v913 = vpop.f32.mrf.mxu0
    %v914 = vadd.f32 0.0, %v913
    %915 = vdwg.mxu0
    %916 = vmatprep.subr.mxu0 %v156
    %917 = vmatpush1.msra.mxu0 %v155
    %918 = vmatprep.subr.mxu0 %v152
    %919 = vmatpush1.msra.mxu0 %v151
    %920 = vmatprep.subr.mxu0 %v148
    %921 = vmatpush1.msra.mxu0 %v147
    %922 = vmatprep.subr.mxu0 %v144
    %923 = vmatpush1.msra.mxu0 %v143
    %924 = vmatprep.subr.mxu0 %v140
    %925 = vmatpush1.msra.mxu0 %v139
    %926 = vmatprep.subr.mxu0 %v136
    %927 = vmatpush1.msra.mxu0 %v135
    %928 = vmatprep.subr.mxu0 %v132
    %929 = vmatpush1.msra.mxu0 %v131
    %930 = vmatprep.subr.mxu0 %v128
    %931 = vmatpush1.msra.mxu0 %v127
    %932 = vmatprep.subr.mxu0 %v124
    %933 = vmatpush1.msra.mxu0 %v123
    %934 = vmatprep.subr.mxu0 %v120
    %935 = vmatpush1.msra.mxu0 %v119
    %936 = vmatprep.subr.mxu0 %v116
    %937 = vmatpush1.msra.mxu0 %v115
    %938 = vmatprep.subr.mxu0 %v112
    %939 = vmatpush1.msra.mxu0 %v111
    %940 = vmatprep.subr.mxu0 %v108
    %941 = vmatpush1.msra.mxu0 %v107
    %942 = vmatprep.subr.mxu0 %v104
    %943 = vmatpush1.msra.mxu0 %v103
    %944 = vmatprep.subr.mxu0 %v100
    %945 = vmatpush1.msra.mxu0 %v99
    %946 = vmatprep.subr.mxu0 %v96
    %947 = vmatpush1.msra.mxu0 %v95
    %948 = vmatprep.subr.mxu0 0.0
    %949 = vmatpush2.msra.mxu0 0.0
    %950 = vmatprep.subr.mxu0 0.0
    %951 = vmatpush2.msra.mxu0 0.0
    %952 = vmatprep.subr.mxu0 0.0
    %953 = vmatpush2.msra.mxu0 0.0
    %954 = vmatprep.subr.mxu0 0.0
    %955 = vmatpush2.msra.mxu0 0.0
    %956 = vmatprep.subr.mxu0 0.0
    %957 = vmatpush2.msra.mxu0 0.0
    %958 = vmatprep.subr.mxu0 0.0
    %959 = vmatpush2.msra.mxu0 0.0
    %960 = vmatprep.subr.mxu0 0.0
    %961 = vmatpush2.msra.mxu0 0.0
    %962 = vmatprep.subr.mxu0 0.0
    %963 = vmatpush2.msra.mxu0 0.0
    %964 = vmatprep.subr.mxu0 0.0
    %965 = vmatpush2.msra.mxu0 0.0
    %966 = vmatprep.subr.mxu0 0.0
    %967 = vmatpush2.msra.mxu0 0.0
    %968 = vmatprep.subr.mxu0 0.0
    %969 = vmatpush2.msra.mxu0 0.0
    %970 = vmatprep.subr.mxu0 0.0
    %971 = vmatpush2.msra.mxu0 0.0
    %972 = vmatprep.subr.mxu0 0.0
    %973 = vmatpush2.msra.mxu0 0.0
    %974 = vmatprep.subr.mxu0 0.0
    %975 = vmatpush2.msra.mxu0 0.0
    %976 = vmatprep.subr.mxu0 0.0
    %977 = vmatpush2.msra.mxu0 0.0
    %978 = vmatprep.subr.mxu0 0.0
    %979 = vmatpush2.msra.mxu0 0.0
    %980 = vmatprep.mubr.f32.mxu0 0.0
    %981 = vmatmul.mubr.f32.gmra.mxu0 %v772
    %v982 = vpop.f32.mrf.mxu0
    %v983 = vadd.f32 %v841, %v982
    %v984 = vpop.f32.mrf.mxu0
    %v985 = vadd.f32 %v843, %v984
    %986 = vdwg.mxu0
    %987 = vmatprep.subr.mxu0 %v158
    %988 = vmatpush1.msra.mxu0 %v157
    %989 = vmatprep.subr.mxu0 %v154
    %990 = vmatpush1.msra.mxu0 %v153
    %991 = vmatprep.subr.mxu0 %v150
    %992 = vmatpush1.msra.mxu0 %v149
    %993 = vmatprep.subr.mxu0 %v146
    %994 = vmatpush1.msra.mxu0 %v145
    %995 = vmatprep.subr.mxu0 %v142
    %996 = vmatpush1.msra.mxu0 %v141
    %997 = vmatprep.subr.mxu0 %v138
    %998 = vmatpush1.msra.mxu0 %v137
    %999 = vmatprep.subr.mxu0 %v134
    %1000 = vmatpush1.msra.mxu0 %v133
    %1001 = vmatprep.subr.mxu0 %v130
    %1002 = vmatpush1.msra.mxu0 %v129
    %1003 = vmatprep.subr.mxu0 %v126
    %1004 = vmatpush1.msra.mxu0 %v125
    %1005 = vmatprep.subr.mxu0 %v122
    %1006 = vmatpush1.msra.mxu0 %v121
    %1007 = vmatprep.subr.mxu0 %v118
    %1008 = vmatpush1.msra.mxu0 %v117
    %1009 = vmatprep.subr.mxu0 %v114
    %1010 = vmatpush1.msra.mxu0 %v113
    %1011 = vmatprep.subr.mxu0 %v110
    %1012 = vmatpush1.msra.mxu0 %v109
    %1013 = vmatprep.subr.mxu0 %v106
    %1014 = vmatpush1.msra.mxu0 %v105
    %1015 = vmatprep.subr.mxu0 %v102
    %1016 = vmatpush1.msra.mxu0 %v101
    %1017 = vmatprep.subr.mxu0 %v98
    %1018 = vmatpush1.msra.mxu0 %v97
    %1019 = vmatprep.subr.mxu0 0.0
    %1020 = vmatpush2.msra.mxu0 0.0
    %1021 = vmatprep.subr.mxu0 0.0
    %1022 = vmatpush2.msra.mxu0 0.0
    %1023 = vmatprep.subr.mxu0 0.0
    %1024 = vmatpush2.msra.mxu0 0.0
    %1025 = vmatprep.subr.mxu0 0.0
    %1026 = vmatpush2.msra.mxu0 0.0
    %1027 = vmatprep.subr.mxu0 0.0
    %1028 = vmatpush2.msra.mxu0 0.0
    %1029 = vmatprep.subr.mxu0 0.0
    %1030 = vmatpush2.msra.mxu0 0.0
    %1031 = vmatprep.subr.mxu0 0.0
    %1032 = vmatpush2.msra.mxu0 0.0
    %1033 = vmatprep.subr.mxu0 0.0
    %1034 = vmatpush2.msra.mxu0 0.0
    %1035 = vmatprep.subr.mxu0 0.0
    %1036 = vmatpush2.msra.mxu0 0.0
    %1037 = vmatprep.subr.mxu0 0.0
    %1038 = vmatpush2.msra.mxu0 0.0
    %1039 = vmatprep.subr.mxu0 0.0
    %1040 = vmatpush2.msra.mxu0 0.0
    %1041 = vmatprep.subr.mxu0 0.0
    %1042 = vmatpush2.msra.mxu0 0.0
    %1043 = vmatprep.subr.mxu0 0.0
    %1044 = vmatpush2.msra.mxu0 0.0
    %1045 = vmatprep.subr.mxu0 0.0
    %1046 = vmatpush2.msra.mxu0 0.0
    %1047 = vmatprep.subr.mxu0 0.0
    %1048 = vmatpush2.msra.mxu0 0.0
    %1049 = vmatprep.subr.mxu0 0.0
    %1050 = vmatpush2.msra.mxu0 0.0
    %1051 = vmatprep.mubr.f32.mxu0 0.0
    %1052 = vmatmul.mubr.f32.gmra.mxu0 %v772
    %v1053 = vpop.f32.mrf.mxu0
    %v1054 = vadd.f32 %v912, %v1053
    %v1055 = vpop.f32.mrf.mxu0
    %v1056 = vadd.f32 %v914, %v1055
    %1057 = vdwg.mxu0
    %v1058 = vld [vmem:[#allocation12] sm:$0xff]
    %vm1059 = vcmask 64512
    %v1061 = vsel %vm1059, %v1058, 0
    %1063 = vmatprep.subr.mxu0 0.0
    %1064 = vmatpush1.msra.mxu0 0.0
    %1065 = vmatprep.subr.mxu0 0.0
    %1066 = vmatpush1.msra.mxu0 0.0
    %1067 = vmatprep.subr.mxu0 0.0
    %1068 = vmatpush1.msra.mxu0 0.0
    %1069 = vmatprep.subr.mxu0 0.0
    %1070 = vmatpush1.msra.mxu0 0.0
    %1071 = vmatprep.subr.mxu0 0.0
    %1072 = vmatpush1.msra.mxu0 0.0
    %1073 = vmatprep.subr.mxu0 0.0
    %1074 = vmatpush1.msra.mxu0 0.0
    %1075 = vmatprep.subr.mxu0 0.0
    %1076 = vmatpush1.msra.mxu0 0.0
    %1077 = vmatprep.subr.mxu0 0.0
    %1078 = vmatpush1.msra.mxu0 0.0
    %1079 = vmatprep.subr.mxu0 0.0
    %1080 = vmatpush1.msra.mxu0 0.0
    %1081 = vmatprep.subr.mxu0 0.0
    %1082 = vmatpush1.msra.mxu0 0.0
    %1083 = vmatprep.subr.mxu0 0.0
    %1084 = vmatpush1.msra.mxu0 0.0
    %1085 = vmatprep.subr.mxu0 0.0
    %1086 = vmatpush1.msra.mxu0 0.0
    %1087 = vmatprep.subr.mxu0 0.0
    %1088 = vmatpush1.msra.mxu0 0.0
    %1089 = vmatprep.subr.mxu0 0.0
    %1090 = vmatpush1.msra.mxu0 0.0
    %1091 = vmatprep.subr.mxu0 0.0
    %1092 = vmatpush1.msra.mxu0 0.0
    %1093 = vmatprep.subr.mxu0 %v92
    %1094 = vmatpush1.msra.mxu0 %v91
    %1095 = vmatprep.subr.mxu0 0.0
    %1096 = vmatpush2.msra.mxu0 0.0
    %1097 = vmatprep.subr.mxu0 0.0
    %1098 = vmatpush2.msra.mxu0 0.0
    %1099 = vmatprep.subr.mxu0 0.0
    %1100 = vmatpush2.msra.mxu0 0.0
    %1101 = vmatprep.subr.mxu0 0.0
    %1102 = vmatpush2.msra.mxu0 0.0
    %1103 = vmatprep.subr.mxu0 0.0
    %1104 = vmatpush2.msra.mxu0 0.0
    %1105 = vmatprep.subr.mxu0 0.0
    %1106 = vmatpush2.msra.mxu0 0.0
    %1107 = vmatprep.subr.mxu0 0.0
    %1108 = vmatpush2.msra.mxu0 0.0
    %1109 = vmatprep.subr.mxu0 0.0
    %1110 = vmatpush2.msra.mxu0 0.0
    %1111 = vmatprep.subr.mxu0 0.0
    %1112 = vmatpush2.msra.mxu0 0.0
    %1113 = vmatprep.subr.mxu0 0.0
    %1114 = vmatpush2.msra.mxu0 0.0
    %1115 = vmatprep.subr.mxu0 0.0
    %1116 = vmatpush2.msra.mxu0 0.0
    %1117 = vmatprep.subr.mxu0 0.0
    %1118 = vmatpush2.msra.mxu0 0.0
    %1119 = vmatprep.subr.mxu0 0.0
    %1120 = vmatpush2.msra.mxu0 0.0
    %1121 = vmatprep.subr.mxu0 0.0
    %1122 = vmatpush2.msra.mxu0 0.0
    %1123 = vmatprep.subr.mxu0 0.0
    %1124 = vmatpush2.msra.mxu0 0.0
    %1125 = vmatprep.subr.mxu0 0.0
    %1126 = vmatpush2.msra.mxu0 0.0
    %1127 = vmatprep.mubr.f32.mxu0 0.0
    %1128 = vmatmul.mubr.f32.gmra.mxu0 %v1061
    %v1129 = vpop.f32.mrf.mxu0
    %v1130 = vadd.f32 0.0, %v1129
    %v1131 = vpop.f32.mrf.mxu0
    %v1132 = vadd.f32 0.0, %v1131
    %1133 = vdwg.mxu0
    %1134 = vmatprep.subr.mxu0 0.0
    %1135 = vmatpush1.msra.mxu0 0.0
    %1136 = vmatprep.subr.mxu0 0.0
    %1137 = vmatpush1.msra.mxu0 0.0
    %1138 = vmatprep.subr.mxu0 0.0
    %1139 = vmatpush1.msra.mxu0 0.0
    %1140 = vmatprep.subr.mxu0 0.0
    %1141 = vmatpush1.msra.mxu0 0.0
    %1142 = vmatprep.subr.mxu0 0.0
    %1143 = vmatpush1.msra.mxu0 0.0
    %1144 = vmatprep.subr.mxu0 0.0
    %1145 = vmatpush1.msra.mxu0 0.0
    %1146 = vmatprep.subr.mxu0 0.0
    %1147 = vmatpush1.msra.mxu0 0.0
    %1148 = vmatprep.subr.mxu0 0.0
    %1149 = vmatpush1.msra.mxu0 0.0
    %1150 = vmatprep.subr.mxu0 0.0
    %1151 = vmatpush1.msra.mxu0 0.0
    %1152 = vmatprep.subr.mxu0 0.0
    %1153 = vmatpush1.msra.mxu0 0.0
    %1154 = vmatprep.subr.mxu0 0.0
    %1155 = vmatpush1.msra.mxu0 0.0
    %1156 = vmatprep.subr.mxu0 0.0
    %1157 = vmatpush1.msra.mxu0 0.0
    %1158 = vmatprep.subr.mxu0 0.0
    %1159 = vmatpush1.msra.mxu0 0.0
    %1160 = vmatprep.subr.mxu0 0.0
    %1161 = vmatpush1.msra.mxu0 0.0
    %1162 = vmatprep.subr.mxu0 0.0
    %1163 = vmatpush1.msra.mxu0 0.0
    %1164 = vmatprep.subr.mxu0 %v94
    %1165 = vmatpush1.msra.mxu0 %v93
    %1166 = vmatprep.subr.mxu0 0.0
    %1167 = vmatpush2.msra.mxu0 0.0
    %1168 = vmatprep.subr.mxu0 0.0
    %1169 = vmatpush2.msra.mxu0 0.0
    %1170 = vmatprep.subr.mxu0 0.0
    %1171 = vmatpush2.msra.mxu0 0.0
    %1172 = vmatprep.subr.mxu0 0.0
    %1173 = vmatpush2.msra.mxu0 0.0
    %1174 = vmatprep.subr.mxu0 0.0
    %1175 = vmatpush2.msra.mxu0 0.0
    %1176 = vmatprep.subr.mxu0 0.0
    %1177 = vmatpush2.msra.mxu0 0.0
    %1178 = vmatprep.subr.mxu0 0.0
    %1179 = vmatpush2.msra.mxu0 0.0
    %1180 = vmatprep.subr.mxu0 0.0
    %1181 = vmatpush2.msra.mxu0 0.0
    %1182 = vmatprep.subr.mxu0 0.0
    %1183 = vmatpush2.msra.mxu0 0.0
    %1184 = vmatprep.subr.mxu0 0.0
    %1185 = vmatpush2.msra.mxu0 0.0
    %1186 = vmatprep.subr.mxu0 0.0
    %1187 = vmatpush2.msra.mxu0 0.0
    %1188 = vmatprep.subr.mxu0 0.0
    %1189 = vmatpush2.msra.mxu0 0.0
    %1190 = vmatprep.subr.mxu0 0.0
    %1191 = vmatpush2.msra.mxu0 0.0
    %1192 = vmatprep.subr.mxu0 0.0
    %1193 = vmatpush2.msra.mxu0 0.0
    %1194 = vmatprep.subr.mxu0 0.0
    %1195 = vmatpush2.msra.mxu0 0.0
    %1196 = vmatprep.subr.mxu0 0.0
    %1197 = vmatpush2.msra.mxu0 0.0
    %1198 = vmatprep.mubr.f32.mxu0 0.0
    %1199 = vmatmul.mubr.f32.gmra.mxu0 %v1061
    %v1200 = vpop.f32.mrf.mxu0
    %v1201 = vadd.f32 0.0, %v1200
    %v1202 = vpop.f32.mrf.mxu0
    %v1203 = vadd.f32 0.0, %v1202
    %1204 = vdwg.mxu0
    %v1205 = vadd.f32 %v983, %v1130
    %v1206 = vadd.f32 %v985, %v1132
    %v1207 = vadd.f32 %v1054, %v1201
    %v1208 = vadd.f32 %v1056, %v1203
    %v1209 = vld [vmem:[%s6] sm:$0xff]
    %1211 = vset.pattern.permute.xlu0 0
    %1212 = vperm.xlu0 %1211, %v1209
    %v1213 = vpop.permute.xlu0 %1212
    %v1215 = vadd.f32 %v1205, %v1213
    %v1216 = vadd.f32 %v1206, %v1213
    %v1217 = vadd.f32 %v1207, %v1213
    %v1218 = vadd.f32 %v1208, %v1213
    %v1219 = vtanh.pop %v1215
    %v1220 = vtanh.pop %v1216
    %v1221 = vtanh.pop %v1217
    %v1222 = vtanh.pop %v1218
    %1223 = vst [vmem:[#allocation13] sm:$0xff] %v1219
    %1224 = vst [vmem:[#allocation13 + $0x8] sm:$0xff] %v1220
    %1225 = vst [vmem:[#allocation13 + $0x10] sm:$0xff] %v1221
    %1226 = vst [vmem:[#allocation13 + $0x18] sm:$0xff] %v1222
    // Predicated region
    $region50: #{tpu_custom_call.1} parent=1 // pred_check
      _
    $region51: #{tpu_custom_call.1} parent=1 // pred_check_branch
      %1228 = sbr.rel (0) target = $region53
    $region52: #{tpu_custom_call.1} parent=1 // pred_region
      %s1230 = ssub.s32 512, 512
      %1231 = vsyncadd [#allocation6], %s1230
      %s1233 = sshll.u32 [#allocation13], 4
      %s1234 = int_to_ptr.vmem [resolvable:$true] %s1233
      %1236 = dma.vmem_to_hbm [thread:$0]  %s1234, 512, %s7, [#allocation6]
    $region53: #{tpu_custom_call.1} parent=1 // pred_fallthru
      _
    // Predicated region
    $region54: #{tpu_custom_call.1} parent=1 // pred_check
      _
    $region55: #{tpu_custom_call.1} parent=1 // pred_check_branch
      %1238 = sbr.rel (0) target = $region57
    $region56: #{tpu_custom_call.1} parent=1 // pred_region
      %1239 = dma.done [#allocation6], 512
    $region57: #{tpu_custom_call.1} parent=1 // pred_fallthru
      _
    %1240 = vsyncpa [#allocation5], 1
    %1241 = vsyncpa [#allocation8], 1
    %1242 = vsyncpa [#allocation11], 1
    %1243 = vsyncpa [#allocation6], 1

</llo_original>
